<compile_context>
chip_gen: v7x
topology: tpu7x:2x2x1
jax: 0.10.0
libtpu: 0.0.40
codegen_flags: <defaults>
</compile_context>

<pallas_src>
import functools

import jax
import jax.numpy as jnp
import numpy as np
from jax.experimental import pallas as pl
from jax.experimental.pallas import tpu as pltpu


def _round_up(x, m):
    return (x + m - 1) // m * m


# ----------------------------------------------------------------------------
# Fused Pallas kernel (one image per grid step, fully VMEM-resident)
# ----------------------------------------------------------------------------
def _submodel4_kernel(patch_ref, w1t_ref, b1_ref, w2t_ref, b2_ref,
                      w3t_ref, b3_ref, o_ref, *, H, W):
    """Channel-major forward: activations are (C, H*W), spatial dim on lanes.

    patch_ref : (1, K1p, H*W)  bf16  im2col of the input (conv1), K1p=pad(9*Cin)
    w1t_ref   : (C1, K1p)      bf16  conv1 weight, BN1 scale folded
    b1_ref    : (C1, 1)        f32   BN1 bias (conv1 has no bias)
    w2t_ref   : (9, C2, C1)    bf16  conv2 weight per tap, BN2 scale folded
    b2_ref    : (C2, 1)        f32   BN2 bias
    w3t_ref   : (C3, C2)       bf16  1x1 conv weight, output-major
    b3_ref    : (C3, 1)        f32   1x1 conv bias
    o_ref     : (1, C3, H*W)   f32   lane-dense channel-major output
    """
    HW = H * W

    # ---- conv1 (im2col done in wrapper) + BN1 + ReLU ------------------------
    y1 = jax.lax.dot_general(
        w1t_ref[...], patch_ref[0],
        dimension_numbers=(((1,), (0,)), ((), ())),
        preferred_element_type=jnp.float32)                       # (C1, HW) f32
    y1 = jnp.maximum(y1 + b1_ref[...], 0.0)

    # ---- conv2: 9-tap accumulation, roll-based replicate-pad taps -----------
    pos = jax.lax.broadcasted_iota(jnp.int32, (1, HW), 1)         # lane index
    x_pos = pos % W
    first_row = pos < W
    last_row = pos >= (H - 1) * W
    first_col = x_pos == 0
    last_col = x_pos == (W - 1)

    def row_tap(oy):                     # oy in {-1, +1}: vertical offset
        r = pltpu.roll(y1, shift=(-oy * W) % HW, axis=1)
        return jnp.where(first_row if oy < 0 else last_row, y1, r)

    def col_tap(v, ox):                  # ox in {-1, 0, +1}: horizontal offset
        if ox == 0:
            return v
        r = pltpu.roll(v, shift=(-ox) % HW, axis=1)
        return jnp.where(first_col if ox < 0 else last_col, v, r)

    rows = [row_tap(-1), y1, row_tap(1)]                          # oy = -1,0,+1
    acc = None
    for ky in range(3):
        for kx in range(3):
            tap = col_tap(rows[ky], kx - 1).astype(jnp.bfloat16)  # (C1, HW)
            part = jax.lax.dot_general(
                w2t_ref[ky * 3 + kx], tap,
                dimension_numbers=(((1,), (0,)), ((), ())),
                preferred_element_type=jnp.float32)               # (C2, HW)
            acc = part if acc is None else acc + part
    y2 = jnp.maximum(acc + b2_ref[...], 0.0).astype(jnp.bfloat16)

    # ---- conv3: 1x1, already channel-major -> no transpose ------------------
    out = jax.lax.dot_general(
        w3t_ref[...], y2,
        dimension_numbers=(((1,), (0,)), ((), ())),
        preferred_element_type=jnp.float32)                       # (C3, HW)
    o_ref[0] = (out + b3_ref[...]).astype(o_ref.dtype)


# ----------------------------------------------------------------------------
# Wrapper: BN folding, weight layout, conv1 im2col, pallas_call
# ----------------------------------------------------------------------------
def fold_bn(gamma, beta, mean, var, eps=1e-5):
    scale = gamma / jnp.sqrt(var + eps)
    bias = beta - mean * scale
    return scale, bias


def _im2col_input(x_nchw, H, W, k1p):
    """NCHW input -> channel-major bf16 im2col patch (N, k1p, H*W)."""
    N, Cin = x_nchw.shape[0], x_nchw.shape[1]
    x = jnp.transpose(x_nchw, (0, 2, 3, 1))                        # NHWC
    xp = jnp.pad(x, ((0, 0), (1, 1), (1, 1), (0, 0)), mode="edge")
    taps = [xp[:, dy:dy + H, dx:dx + W, :]
            for dy in range(3) for dx in range(3)]
    patch = jnp.concatenate(taps, axis=-1)                         # (N,H,W,9*Cin)
    patch = jnp.pad(patch, ((0, 0), (0, 0), (0, 0), (0, k1p - 9 * Cin)))
    patch = patch.reshape(N, H * W, k1p)
    return jnp.transpose(patch, (0, 2, 1)).astype(jnp.bfloat16)    # (N,k1p,HW)


@jax.jit
def submodel4_forward(x_nchw, params):
    N, Cin, H, W = x_nchw.shape
    C1 = params["w1"].shape[-1]
    C2 = params["w2"].shape[-1]
    C3 = params["w3"].shape[-1]
    HW = H * W
    k1p = _round_up(9 * Cin, 8)          # sublane-align conv1's K dim

    s1, b1 = fold_bn(params["bn1_gamma"], params["bn1_beta"],
                     params["bn1_mean"], params["bn1_var"])
    s2, b2 = fold_bn(params["bn2_gamma"], params["bn2_beta"],
                     params["bn2_mean"], params["bn2_var"])

    # conv1: HWIO * bn1 scale -> (C1, K1p) output-major, bf16
    w1 = params["w1"] * s1[None, None, None, :]
    w1 = jnp.pad(w1.reshape(9 * Cin, C1), ((0, k1p - 9 * Cin), (0, 0)))
    w1t = w1.T.astype(jnp.bfloat16)                                # (C1, K1p)
    b1v = b1.reshape(C1, 1).astype(jnp.float32)

    # conv2: HWIO * bn2 scale -> per-tap output-major (9, C2, C1), bf16
    w2 = params["w2"] * s2[None, None, None, :]
    w2t = jnp.transpose(w2.reshape(9, C1, C2), (0, 2, 1)).astype(jnp.bfloat16)
    b2v = b2.reshape(C2, 1).astype(jnp.float32)

    # conv3 (1x1): output-major (C3, C2), bf16
    w3t = params["w3"].T.astype(jnp.bfloat16)
    b3v = params["b3"].reshape(C3, 1).astype(jnp.float32)

    patch = _im2col_input(x_nchw, H, W, k1p)                       # (N,K1p,HW)

    flops = 2 * N * HW * (9 * Cin * C1 + 9 * C1 * C2 + C2 * C3)
    bytes_accessed = (patch.size * 2 + w1t.size * 2 + w2t.size * 2
                      + w3t.size * 2
                      + (b1v.size + b2v.size + b3v.size) * 4
                      + N * C3 * HW * 4)

    kern = functools.partial(_submodel4_kernel, H=H, W=W)
    out = pl.pallas_call(
        kern,
        out_shape=jax.ShapeDtypeStruct((N, C3, HW), jnp.float32),
        grid=(N,),
        in_specs=[
            pl.BlockSpec((1, k1p, HW), lambda n: (n, 0, 0)),
            pl.BlockSpec((C1, k1p), lambda n: (0, 0)),
            pl.BlockSpec((C1, 1), lambda n: (0, 0)),
            pl.BlockSpec((9, C2, C1), lambda n: (0, 0, 0)),
            pl.BlockSpec((C2, 1), lambda n: (0, 0)),
            pl.BlockSpec((C3, C2), lambda n: (0, 0)),
            pl.BlockSpec((C3, 1), lambda n: (0, 0)),
        ],
        out_specs=pl.BlockSpec((1, C3, HW), lambda n: (n, 0, 0)),
        compiler_params=pltpu.CompilerParams(
            dimension_semantics=("parallel",),
            vmem_limit_bytes=32 * 1024 * 1024),   # raise for much larger H*W
        cost_estimate=pl.CostEstimate(
            flops=flops, transcendentals=0, bytes_accessed=bytes_accessed),
    )(patch, w1t, b1v, w2t, b2v, w3t, b3v)

    # (N, C3, H*W) -> (N, C3, H, W): contiguous reshape, no transpose.
    return out.reshape(N, C3, H, W)


# ----------------------------------------------------------------------------
# Pure-JAX f32 reference (for correctness checking)
# ----------------------------------------------------------------------------
def _ref_conv3x3(x_nhwc, w, scale, bias, relu):
    xpad = jnp.pad(x_nhwc, ((0, 0), (1, 1), (1, 1), (0, 0)), mode="edge")
    y = jax.lax.conv_general_dilated(
        xpad, w, window_strides=(1, 1), padding="VALID",
        dimension_numbers=("NHWC", "HWIO", "NHWC"))
    y = y * scale + bias
    return jnp.maximum(y, 0.0) if relu else y


def submodel4_ref(x_nchw, params):
    x = jnp.transpose(x_nchw, (0, 2, 3, 1))
    s1, b1 = fold_bn(params["bn1_gamma"], params["bn1_beta"],
                     params["bn1_mean"], params["bn1_var"])
    s2, b2 = fold_bn(params["bn2_gamma"], params["bn2_beta"],
                     params["bn2_mean"], params["bn2_var"])
    x = _ref_conv3x3(x, params["w1"], s1, b1, True)
    x = _ref_conv3x3(x, params["w2"], s2, b2, True)
    y = jnp.einsum("nhwc,co->nhwo", x, params["w3"]) + params["b3"]
    return jnp.transpose(y, (0, 3, 1, 2))


# ----------------------------------------------------------------------------
# Deterministic parameter init
# ----------------------------------------------------------------------------
def init_params(key, in_channels, out_channels):
    ks = jax.random.split(key, 10)
    mid = 32
    return {
        # conv weights stored as (kh, kw, cin, cout); w3 as (cin, cout)
        "w1": 0.1 * jax.random.normal(ks[0], (3, 3, in_channels, mid), jnp.float32),
        "w2": 0.1 * jax.random.normal(ks[1], (3, 3, mid, out_channels), jnp.float32),
        "w3": 0.1 * jax.random.normal(ks[2], (out_channels, out_channels), jnp.float32),
        "b3": 0.05 * jax.random.normal(ks[3], (out_channels,), jnp.float32),
        "bn1_gamma": 1.0 + 0.1 * jax.random.normal(ks[4], (mid,), jnp.float32),
        "bn1_beta": 0.1 * jax.random.normal(ks[5], (mid,), jnp.float32),
        "bn1_mean": 0.1 * jax.random.normal(ks[6], (mid,), jnp.float32),
        "bn1_var": 0.5 + jnp.abs(jax.random.normal(ks[7], (mid,), jnp.float32)),
        "bn2_gamma": 1.0 + 0.1 * jax.random.normal(ks[8], (out_channels,), jnp.float32),
        "bn2_beta": 0.1 * jax.random.normal(ks[9], (out_channels,), jnp.float32),
        "bn2_mean": jnp.zeros((out_channels,), jnp.float32),
        "bn2_var": jnp.ones((out_channels,), jnp.float32),
    }


if __name__ == "__main__":
    key = jax.random.PRNGKey(0)
    k_x, k_p = jax.random.split(key)

    N, Cin, H, W = 2, 4, 16, 16
    Cout = 20
    x = jax.random.normal(k_x, (N, Cin, H, W), jnp.float32)   # NCHW like PyTorch
    params = init_params(k_p, Cin, Cout)

    out = submodel4_forward(x, params)
    out = jax.block_until_ready(out)
    assert out.shape == (N, Cout, H, W), out.shape

    ref = jax.block_until_ready(submodel4_ref(x, params))
    # bf16 MXU operands with f32 accumulation -> loosened tolerance vs f32 ref.
    np.testing.assert_allclose(np.asarray(out), np.asarray(ref),
                               rtol=3e-2, atol=3e-2)

    print("KERNEL_OK")
</pallas_src>

<mosaic_0001>
module attributes {stable_mosaic.version = 11 : i64} {
  func.func @_submodel4_kernel(%arg0: i32, %arg1: memref<1x40x256xbf16, #tpu.memory_space<vmem>>, %arg2: memref<32x40xbf16, #tpu.memory_space<vmem>>, %arg3: memref<32x1xf32, #tpu.memory_space<vmem>>, %arg4: memref<9x20x32xbf16, #tpu.memory_space<vmem>>, %arg5: memref<20x1xf32, #tpu.memory_space<vmem>>, %arg6: memref<20x20xbf16, #tpu.memory_space<vmem>>, %arg7: memref<20x1xf32, #tpu.memory_space<vmem>>, %arg8: memref<1x20x256xf32, #tpu.memory_space<vmem>>) attributes {dimension_semantics = [#tpu.dimension_semantics<parallel>], iteration_bounds = array<i64: 2>, scalar_prefetch = 0 : i64, scratch_operands = 0 : i64, tpu.core_type = #tpu.core_type<tc>, window_params = [{transform_indices = @transform_0, window_bounds = array<i64: 1, 40, 256>}, {pipeline_mode = #tpu.pipeline_mode<synchronous>, transform_indices = @transform_1, window_bounds = array<i64: 32, 40>}, {pipeline_mode = #tpu.pipeline_mode<synchronous>, transform_indices = @transform_2, window_bounds = array<i64: 32, 1>}, {pipeline_mode = #tpu.pipeline_mode<synchronous>, transform_indices = @transform_3, window_bounds = array<i64: 9, 20, 32>}, {pipeline_mode = #tpu.pipeline_mode<synchronous>, transform_indices = @transform_4, window_bounds = array<i64: 20, 1>}, {pipeline_mode = #tpu.pipeline_mode<synchronous>, transform_indices = @transform_5, window_bounds = array<i64: 20, 20>}, {pipeline_mode = #tpu.pipeline_mode<synchronous>, transform_indices = @transform_6, window_bounds = array<i64: 20, 1>}, {transform_indices = @transform_7, window_bounds = array<i64: 1, 20, 256>}]} {
    %c0 = arith.constant 0 : index
    %c0_0 = arith.constant 0 : index
    %0 = vector.load %arg2[%c0, %c0_0] : memref<32x40xbf16, #tpu.memory_space<vmem>>, vector<32x40xbf16>
    %c0_1 = arith.constant 0 : index
    %c0_2 = arith.constant 0 : index
    %c0_3 = arith.constant 0 : index
    %1 = vector.load %arg1[%c0_1, %c0_2, %c0_3] : memref<1x40x256xbf16, #tpu.memory_space<vmem>>, vector<1x40x256xbf16>
    %2 = vector.shape_cast %1 : vector<1x40x256xbf16> to vector<40x256xbf16>
    %cst = arith.constant dense<0.000000e+00> : vector<32x256xf32>
    %3 = tpu.matmul %0, %2, %cst {dimension_numbers = #tpu.dot_dimension_numbers<[1], [0], [0], [1], [0, 0, 1, 1], [], []>} : vector<32x40xbf16>, vector<40x256xbf16>, vector<32x256xf32> -> vector<32x256xf32>
    %c0_4 = arith.constant 0 : index
    %c0_5 = arith.constant 0 : index
    %4 = vector.load %arg3[%c0_4, %c0_5] : memref<32x1xf32, #tpu.memory_space<vmem>>, vector<32x1xf32>
    %5 = vector.broadcast %4 : vector<32x1xf32> to vector<32x256xf32>
    %6 = arith.addf %3, %5 : vector<32x256xf32>
    %cst_6 = arith.constant 0.000000e+00 : f32
    %7 = vector.broadcast %cst_6 : f32 to vector<32x256xf32>
    %8 = arith.maximumf %6, %7 : vector<32x256xf32>
    %9 = tpu.iota {dimensions = array<i32: 1>} : vector<1x256xi32>
    %c16_i32 = arith.constant 16 : i32
    %c0_i32 = arith.constant 0 : i32
    %10 = arith.cmpi eq, %c16_i32, %c0_i32 : i32
    %c1_i32 = arith.constant 1 : i32
    %11 = arith.select %10, %c1_i32, %c16_i32 : i32
    %12 = vector.broadcast %11 : i32 to vector<1x256xi32>
    %13 = arith.remsi %9, %12 : vector<1x256xi32>
    %c0_i32_7 = arith.constant 0 : i32
    %14 = vector.broadcast %c0_i32_7 : i32 to vector<1x256xi32>
    %15 = arith.cmpi ne, %13, %14 : vector<1x256xi32>
    %c0_i32_8 = arith.constant 0 : i32
    %16 = vector.broadcast %c0_i32_8 : i32 to vector<1x256xi32>
    %17 = arith.cmpi slt, %13, %16 : vector<1x256xi32>
    %c0_i32_9 = arith.constant 0 : i32
    %18 = arith.cmpi slt, %11, %c0_i32_9 : i32
    %19 = vector.broadcast %18 : i1 to vector<1x256xi1>
    %20 = vector.broadcast %19 : vector<1x256xi1> to vector<1x256xi1>
    %21 = arith.xori %17, %20 : vector<1x256xi1>
    %22 = arith.andi %21, %15 : vector<1x256xi1>
    %23 = vector.broadcast %11 : i32 to vector<1x256xi32>
    %24 = arith.addi %13, %23 : vector<1x256xi32>
    %25 = arith.select %22, %24, %13 : vector<1x256xi1>, vector<1x256xi32>
    %c16_i32_10 = arith.constant 16 : i32
    %26 = vector.broadcast %c16_i32_10 : i32 to vector<1x256xi32>
    %27 = arith.cmpi slt, %9, %26 : vector<1x256xi32>
    %c240_i32 = arith.constant 240 : i32
    %28 = vector.broadcast %c240_i32 : i32 to vector<1x256xi32>
    %29 = arith.cmpi sge, %9, %28 : vector<1x256xi32>
    %c0_i32_11 = arith.constant 0 : i32
    %30 = vector.broadcast %c0_i32_11 : i32 to vector<1x256xi32>
    %31 = arith.cmpi eq, %25, %30 : vector<1x256xi32>
    %c15_i32 = arith.constant 15 : i32
    %32 = vector.broadcast %c15_i32 : i32 to vector<1x256xi32>
    %33 = arith.cmpi eq, %25, %32 : vector<1x256xi32>
    %c16_i32_12 = arith.constant 16 : i32
    %34 = tpu.dynamic_rotate %8 by %c16_i32_12 dim 1 : vector<32x256xf32>, i32 -> vector<32x256xf32>
    %35 = vector.shape_cast %27 : vector<1x256xi1> to vector<1x256xi1>
    %36 = vector.broadcast %35 : vector<1x256xi1> to vector<32x256xi1>
    %37 = arith.select %36, %8, %34 : vector<32x256xi1>, vector<32x256xf32>
    %c240_i32_13 = arith.constant 240 : i32
    %38 = tpu.dynamic_rotate %8 by %c240_i32_13 dim 1 : vector<32x256xf32>, i32 -> vector<32x256xf32>
    %39 = vector.shape_cast %29 : vector<1x256xi1> to vector<1x256xi1>
    %40 = vector.broadcast %39 : vector<1x256xi1> to vector<32x256xi1>
    %41 = arith.select %40, %8, %38 : vector<32x256xi1>, vector<32x256xf32>
    %c1_i32_14 = arith.constant 1 : i32
    %42 = tpu.dynamic_rotate %37 by %c1_i32_14 dim 1 : vector<32x256xf32>, i32 -> vector<32x256xf32>
    %43 = vector.shape_cast %31 : vector<1x256xi1> to vector<1x256xi1>
    %44 = vector.broadcast %43 : vector<1x256xi1> to vector<32x256xi1>
    %45 = arith.select %44, %37, %42 : vector<32x256xi1>, vector<32x256xf32>
    %46 = arith.truncf %45 : vector<32x256xf32> to vector<32x256xbf16>
    %c0_15 = arith.constant 0 : index
    %c0_16 = arith.constant 0 : index
    %c0_17 = arith.constant 0 : index
    %47 = vector.load %arg4[%c0_15, %c0_16, %c0_17] : memref<9x20x32xbf16, #tpu.memory_space<vmem>>, vector<1x20x32xbf16>
    %48 = vector.shape_cast %47 : vector<1x20x32xbf16> to vector<20x32xbf16>
    %cst_18 = arith.constant dense<0.000000e+00> : vector<20x256xf32>
    %49 = tpu.matmul %48, %46, %cst_18 {dimension_numbers = #tpu.dot_dimension_numbers<[1], [0], [0], [1], [0, 0, 1, 1], [], []>} : vector<20x32xbf16>, vector<32x256xbf16>, vector<20x256xf32> -> vector<20x256xf32>
    %50 = arith.truncf %37 : vector<32x256xf32> to vector<32x256xbf16>
    %c1 = arith.constant 1 : index
    %c0_19 = arith.constant 0 : index
    %c0_20 = arith.constant 0 : index
    %51 = vector.load %arg4[%c1, %c0_19, %c0_20] : memref<9x20x32xbf16, #tpu.memory_space<vmem>>, vector<1x20x32xbf16>
    %52 = vector.shape_cast %51 : vector<1x20x32xbf16> to vector<20x32xbf16>
    %cst_21 = arith.constant dense<0.000000e+00> : vector<20x256xf32>
    %53 = tpu.matmul %52, %50, %cst_21 {dimension_numbers = #tpu.dot_dimension_numbers<[1], [0], [0], [1], [0, 0, 1, 1], [], []>} : vector<20x32xbf16>, vector<32x256xbf16>, vector<20x256xf32> -> vector<20x256xf32>
    %54 = arith.addf %49, %53 : vector<20x256xf32>
    %c255_i32 = arith.constant 255 : i32
    %55 = tpu.dynamic_rotate %37 by %c255_i32 dim 1 : vector<32x256xf32>, i32 -> vector<32x256xf32>
    %56 = vector.shape_cast %33 : vector<1x256xi1> to vector<1x256xi1>
    %57 = vector.broadcast %56 : vector<1x256xi1> to vector<32x256xi1>
    %58 = arith.select %57, %37, %55 : vector<32x256xi1>, vector<32x256xf32>
    %59 = arith.truncf %58 : vector<32x256xf32> to vector<32x256xbf16>
    %c2 = arith.constant 2 : index
    %c0_22 = arith.constant 0 : index
    %c0_23 = arith.constant 0 : index
    %60 = vector.load %arg4[%c2, %c0_22, %c0_23] : memref<9x20x32xbf16, #tpu.memory_space<vmem>>, vector<1x20x32xbf16>
    %61 = vector.shape_cast %60 : vector<1x20x32xbf16> to vector<20x32xbf16>
    %cst_24 = arith.constant dense<0.000000e+00> : vector<20x256xf32>
    %62 = tpu.matmul %61, %59, %cst_24 {dimension_numbers = #tpu.dot_dimension_numbers<[1], [0], [0], [1], [0, 0, 1, 1], [], []>} : vector<20x32xbf16>, vector<32x256xbf16>, vector<20x256xf32> -> vector<20x256xf32>
    %63 = arith.addf %54, %62 : vector<20x256xf32>
    %c1_i32_25 = arith.constant 1 : i32
    %64 = tpu.dynamic_rotate %8 by %c1_i32_25 dim 1 : vector<32x256xf32>, i32 -> vector<32x256xf32>
    %65 = vector.shape_cast %31 : vector<1x256xi1> to vector<1x256xi1>
    %66 = vector.broadcast %65 : vector<1x256xi1> to vector<32x256xi1>
    %67 = arith.select %66, %8, %64 : vector<32x256xi1>, vector<32x256xf32>
    %68 = arith.truncf %67 : vector<32x256xf32> to vector<32x256xbf16>
    %c3 = arith.constant 3 : index
    %c0_26 = arith.constant 0 : index
    %c0_27 = arith.constant 0 : index
    %69 = vector.load %arg4[%c3, %c0_26, %c0_27] : memref<9x20x32xbf16, #tpu.memory_space<vmem>>, vector<1x20x32xbf16>
    %70 = vector.shape_cast %69 : vector<1x20x32xbf16> to vector<20x32xbf16>
    %cst_28 = arith.constant dense<0.000000e+00> : vector<20x256xf32>
    %71 = tpu.matmul %70, %68, %cst_28 {dimension_numbers = #tpu.dot_dimension_numbers<[1], [0], [0], [1], [0, 0, 1, 1], [], []>} : vector<20x32xbf16>, vector<32x256xbf16>, vector<20x256xf32> -> vector<20x256xf32>
    %72 = arith.addf %63, %71 : vector<20x256xf32>
    %73 = arith.truncf %8 : vector<32x256xf32> to vector<32x256xbf16>
    %c4 = arith.constant 4 : index
    %c0_29 = arith.constant 0 : index
    %c0_30 = arith.constant 0 : index
    %74 = vector.load %arg4[%c4, %c0_29, %c0_30] : memref<9x20x32xbf16, #tpu.memory_space<vmem>>, vector<1x20x32xbf16>
    %75 = vector.shape_cast %74 : vector<1x20x32xbf16> to vector<20x32xbf16>
    %cst_31 = arith.constant dense<0.000000e+00> : vector<20x256xf32>
    %76 = tpu.matmul %75, %73, %cst_31 {dimension_numbers = #tpu.dot_dimension_numbers<[1], [0], [0], [1], [0, 0, 1, 1], [], []>} : vector<20x32xbf16>, vector<32x256xbf16>, vector<20x256xf32> -> vector<20x256xf32>
    %77 = arith.addf %72, %76 : vector<20x256xf32>
    %c255_i32_32 = arith.constant 255 : i32
    %78 = tpu.dynamic_rotate %8 by %c255_i32_32 dim 1 : vector<32x256xf32>, i32 -> vector<32x256xf32>
    %79 = vector.shape_cast %33 : vector<1x256xi1> to vector<1x256xi1>
    %80 = vector.broadcast %79 : vector<1x256xi1> to vector<32x256xi1>
    %81 = arith.select %80, %8, %78 : vector<32x256xi1>, vector<32x256xf32>
    %82 = arith.truncf %81 : vector<32x256xf32> to vector<32x256xbf16>
    %c5 = arith.constant 5 : index
    %c0_33 = arith.constant 0 : index
    %c0_34 = arith.constant 0 : index
    %83 = vector.load %arg4[%c5, %c0_33, %c0_34] : memref<9x20x32xbf16, #tpu.memory_space<vmem>>, vector<1x20x32xbf16>
    %84 = vector.shape_cast %83 : vector<1x20x32xbf16> to vector<20x32xbf16>
    %cst_35 = arith.constant dense<0.000000e+00> : vector<20x256xf32>
    %85 = tpu.matmul %84, %82, %cst_35 {dimension_numbers = #tpu.dot_dimension_numbers<[1], [0], [0], [1], [0, 0, 1, 1], [], []>} : vector<20x32xbf16>, vector<32x256xbf16>, vector<20x256xf32> -> vector<20x256xf32>
    %86 = arith.addf %77, %85 : vector<20x256xf32>
    %c1_i32_36 = arith.constant 1 : i32
    %87 = tpu.dynamic_rotate %41 by %c1_i32_36 dim 1 : vector<32x256xf32>, i32 -> vector<32x256xf32>
    %88 = vector.shape_cast %31 : vector<1x256xi1> to vector<1x256xi1>
    %89 = vector.broadcast %88 : vector<1x256xi1> to vector<32x256xi1>
    %90 = arith.select %89, %41, %87 : vector<32x256xi1>, vector<32x256xf32>
    %91 = arith.truncf %90 : vector<32x256xf32> to vector<32x256xbf16>
    %c6 = arith.constant 6 : index
    %c0_37 = arith.constant 0 : index
    %c0_38 = arith.constant 0 : index
    %92 = vector.load %arg4[%c6, %c0_37, %c0_38] : memref<9x20x32xbf16, #tpu.memory_space<vmem>>, vector<1x20x32xbf16>
    %93 = vector.shape_cast %92 : vector<1x20x32xbf16> to vector<20x32xbf16>
    %cst_39 = arith.constant dense<0.000000e+00> : vector<20x256xf32>
    %94 = tpu.matmul %93, %91, %cst_39 {dimension_numbers = #tpu.dot_dimension_numbers<[1], [0], [0], [1], [0, 0, 1, 1], [], []>} : vector<20x32xbf16>, vector<32x256xbf16>, vector<20x256xf32> -> vector<20x256xf32>
    %95 = arith.addf %86, %94 : vector<20x256xf32>
    %96 = arith.truncf %41 : vector<32x256xf32> to vector<32x256xbf16>
    %c7 = arith.constant 7 : index
    %c0_40 = arith.constant 0 : index
    %c0_41 = arith.constant 0 : index
    %97 = vector.load %arg4[%c7, %c0_40, %c0_41] : memref<9x20x32xbf16, #tpu.memory_space<vmem>>, vector<1x20x32xbf16>
    %98 = vector.shape_cast %97 : vector<1x20x32xbf16> to vector<20x32xbf16>
    %cst_42 = arith.constant dense<0.000000e+00> : vector<20x256xf32>
    %99 = tpu.matmul %98, %96, %cst_42 {dimension_numbers = #tpu.dot_dimension_numbers<[1], [0], [0], [1], [0, 0, 1, 1], [], []>} : vector<20x32xbf16>, vector<32x256xbf16>, vector<20x256xf32> -> vector<20x256xf32>
    %100 = arith.addf %95, %99 : vector<20x256xf32>
    %c255_i32_43 = arith.constant 255 : i32
    %101 = tpu.dynamic_rotate %41 by %c255_i32_43 dim 1 : vector<32x256xf32>, i32 -> vector<32x256xf32>
    %102 = vector.shape_cast %33 : vector<1x256xi1> to vector<1x256xi1>
    %103 = vector.broadcast %102 : vector<1x256xi1> to vector<32x256xi1>
    %104 = arith.select %103, %41, %101 : vector<32x256xi1>, vector<32x256xf32>
    %105 = arith.truncf %104 : vector<32x256xf32> to vector<32x256xbf16>
    %c8 = arith.constant 8 : index
    %c0_44 = arith.constant 0 : index
    %c0_45 = arith.constant 0 : index
    %106 = vector.load %arg4[%c8, %c0_44, %c0_45] : memref<9x20x32xbf16, #tpu.memory_space<vmem>>, vector<1x20x32xbf16>
    %107 = vector.shape_cast %106 : vector<1x20x32xbf16> to vector<20x32xbf16>
    %cst_46 = arith.constant dense<0.000000e+00> : vector<20x256xf32>
    %108 = tpu.matmul %107, %105, %cst_46 {dimension_numbers = #tpu.dot_dimension_numbers<[1], [0], [0], [1], [0, 0, 1, 1], [], []>} : vector<20x32xbf16>, vector<32x256xbf16>, vector<20x256xf32> -> vector<20x256xf32>
    %109 = arith.addf %100, %108 : vector<20x256xf32>
    %c0_47 = arith.constant 0 : index
    %c0_48 = arith.constant 0 : index
    %110 = vector.load %arg5[%c0_47, %c0_48] : memref<20x1xf32, #tpu.memory_space<vmem>>, vector<20x1xf32>
    %111 = vector.broadcast %110 : vector<20x1xf32> to vector<20x256xf32>
    %112 = arith.addf %109, %111 : vector<20x256xf32>
    %cst_49 = arith.constant 0.000000e+00 : f32
    %113 = vector.broadcast %cst_49 : f32 to vector<20x256xf32>
    %114 = arith.maximumf %112, %113 : vector<20x256xf32>
    %115 = arith.truncf %114 : vector<20x256xf32> to vector<20x256xbf16>
    %c0_50 = arith.constant 0 : index
    %c0_51 = arith.constant 0 : index
    %116 = vector.load %arg6[%c0_50, %c0_51] : memref<20x20xbf16, #tpu.memory_space<vmem>>, vector<20x20xbf16>
    %cst_52 = arith.constant dense<0.000000e+00> : vector<20x256xf32>
    %117 = tpu.matmul %116, %115, %cst_52 {dimension_numbers = #tpu.dot_dimension_numbers<[1], [0], [0], [1], [0, 0, 1, 1], [], []>} : vector<20x20xbf16>, vector<20x256xbf16>, vector<20x256xf32> -> vector<20x256xf32>
    %c0_53 = arith.constant 0 : index
    %c0_54 = arith.constant 0 : index
    %118 = vector.load %arg7[%c0_53, %c0_54] : memref<20x1xf32, #tpu.memory_space<vmem>>, vector<20x1xf32>
    %119 = vector.broadcast %118 : vector<20x1xf32> to vector<20x256xf32>
    %120 = arith.addf %117, %119 : vector<20x256xf32>
    %c0_55 = arith.constant 0 : index
    %c0_56 = arith.constant 0 : index
    %c0_57 = arith.constant 0 : index
    %121 = vector.load %arg8[%c0_55, %c0_56, %c0_57] : memref<1x20x256xf32, #tpu.memory_space<vmem>>, vector<1x20x256xf32>
    %122 = vector.shape_cast %121 : vector<1x20x256xf32> to vector<20x256xf32>
    %123 = vector.shape_cast %120 : vector<20x256xf32> to vector<1x20x256xf32>
    tpu.vector_store %arg8[%c0_55, %c0_56, %c0_57], %123 {strides = array<i32>} : memref<1x20x256xf32, #tpu.memory_space<vmem>>, vector<1x20x256xf32>,
    return
  }
  func.func @transform_0(%arg0: i32) -> (i32, i32, i32) {
    %c0_i32 = arith.constant 0 : i32
    %c0_i32_0 = arith.constant 0 : i32
    %c0_i32_1 = arith.constant 0 : i32
    return %arg0, %c0_i32, %c0_i32_0 : i32, i32, i32
  }
  func.func @transform_1(%arg0: i32) -> (i32, i32) {
    %c0_i32 = arith.constant 0 : i32
    %c0_i32_0 = arith.constant 0 : i32
    %c0_i32_1 = arith.constant 0 : i32
    return %c0_i32, %c0_i32_0 : i32, i32
  }
  func.func @transform_2(%arg0: i32) -> (i32, i32) {
    %c0_i32 = arith.constant 0 : i32
    %c0_i32_0 = arith.constant 0 : i32
    %c0_i32_1 = arith.constant 0 : i32
    return %c0_i32, %c0_i32_0 : i32, i32
  }
  func.func @transform_3(%arg0: i32) -> (i32, i32, i32) {
    %c0_i32 = arith.constant 0 : i32
    %c0_i32_0 = arith.constant 0 : i32
    %c0_i32_1 = arith.constant 0 : i32
    %c0_i32_2 = arith.constant 0 : i32
    return %c0_i32, %c0_i32_0, %c0_i32_1 : i32, i32, i32
  }
  func.func @transform_4(%arg0: i32) -> (i32, i32) {
    %c0_i32 = arith.constant 0 : i32
    %c0_i32_0 = arith.constant 0 : i32
    %c0_i32_1 = arith.constant 0 : i32
    return %c0_i32, %c0_i32_0 : i32, i32
  }
  func.func @transform_5(%arg0: i32) -> (i32, i32) {
    %c0_i32 = arith.constant 0 : i32
    %c0_i32_0 = arith.constant 0 : i32
    %c0_i32_1 = arith.constant 0 : i32
    return %c0_i32, %c0_i32_0 : i32, i32
  }
  func.func @transform_6(%arg0: i32) -> (i32, i32) {
    %c0_i32 = arith.constant 0 : i32
    %c0_i32_0 = arith.constant 0 : i32
    %c0_i32_1 = arith.constant 0 : i32
    return %c0_i32, %c0_i32_0 : i32, i32
  }
  func.func @transform_7(%arg0: i32) -> (i32, i32, i32) {
    %c0_i32 = arith.constant 0 : i32
    %c0_i32_0 = arith.constant 0 : i32
    %c0_i32_1 = arith.constant 0 : i32
    return %arg0, %c0_i32, %c0_i32_0 : i32, i32, i32
  }
}

</mosaic_0001>

<llo_original>
// kernel: submodel4_forward.1
$region0: #{submodel4_forward.1}
  #allocation0 [shape = 'u32[]', space=smem, size = 0x4, offset = 0x4, fixed_abs, tag = 'smem constant byte address 0x4 - core index']
  #allocation1 [shape = 'u32[144,128]{1,0:T(1,128)}', space=vmem, size = 0x12000, scoped, tag = 'internal scratch']
  %s0 = inlined_call_operand.vmem [shape: bf16[2,40,256], index: 0, kind: input, shape index: {}]
  %s1 = inlined_call_operand.vmem [shape: bf16[32,40], index: 1, kind: input, shape index: {}]
  %s2 = inlined_call_operand.vmem [shape: f32[32,1], index: 2, kind: input, shape index: {}]
  %s3 = inlined_call_operand.vmem [shape: bf16[9,20,32], index: 3, kind: input, shape index: {}]
  %s4 = inlined_call_operand.vmem [shape: f32[20,1], index: 4, kind: input, shape index: {}]
  %s5 = inlined_call_operand.vmem [shape: bf16[20,20], index: 5, kind: input, shape index: {}]
  %s6 = inlined_call_operand.vmem [shape: f32[20,1], index: 6, kind: input, shape index: {}]
  %s7 = inlined_call_operand.vmem [shape: f32[2,20,256], index: 7, kind: output, shape index: {}]
  %s8 = sld [smem:[#allocation0]]
  $region61: #{submodel4_forward.1} parent=0
    _
  %s10 = ssub.s32 1, %s8
  %s11 = scalar_select 0, %s10, %s8
  loop: start=0, step=1, limit=4
  $region2: #{submodel4_forward.1} parent=0 // loop_pre_header
    _
  $region3: #{submodel4_forward.1} parent=0 // loop_header
    %s13 = sphi 0, %s17
    %p14 = scmp.ge.s32.totalorder %s13, 4
    %s23 = sphi 0, %s25
    %s26 = sphi 0, %s23
    %s27 = sphi 0, %s26
    %s43 = sphi 0, %s27
    %s47 = sphi 0, %s47
    %s49 = sphi 0, %s47
    %s50 = sphi 0, %s49
    %s64 = sphi 0, %s50
    %s68 = sphi 0, %s68
    %s70 = sphi 0, %s68
    %s71 = sphi 0, %s70
    %s85 = sphi 0, %s71
    %s89 = sphi 0, %s89
    %s91 = sphi 0, %s89
    %s92 = sphi 0, %s91
    %s106 = sphi 0, %s92
    %s110 = sphi 0, %s110
    %s112 = sphi 0, %s110
    %s113 = sphi 0, %s112
    %s127 = sphi 0, %s113
    %s131 = sphi 0, %s131
    %s133 = sphi 0, %s131
    %s134 = sphi 0, %s133
    %s148 = sphi 0, %s134
    %s152 = sphi 0, %s152
    %s154 = sphi 0, %s152
    %s155 = sphi 0, %s154
    %s169 = sphi 0, %s155
    %s175 = sphi 0, %s177
    %s178 = sphi 0, %s175
    %s179 = sphi 0, %s178
    %s195 = sphi 0, %s179
  $region4: #{submodel4_forward.1} parent=0 // loop_header_branch
    %16 = sbr.rel (%p14) target = $region8
  $region5: #{submodel4_forward.1} parent=0 // loop_body
    %s18 = ssub.s32 %s13, 1
    %s19 = ssub.s32 %s13, 2
    %s20 = sadd.s32 %s13, 1
    %s21 = ssub.s32 %s13, %s20
    %p22 = scmp.eq.s32.totalorder %s21, 0
    %s24 = sadd.s32 %s23, 1
    %s25 = scalar_select %p22, %s23, %s24
    %p28 = pneg %p22
    %p29 = scmp.eq.s32.totalorder %s13, 1
    %p30 = por %p28, %p29
    %p31 = scmp.ne.s32.totalorder %s23, %s26
    %p32 = scmp.eq.s32.totalorder %s13, 0
    %p33 = por %p31, %p32
    %p34 = scmp.ne.s32.totalorder %s23, %s26
    %p35 = scmp.eq.s32.totalorder %s18, 1
    %p36 = por %p34, %p35
    %p37 = scmp.ne.s32.totalorder %s26, %s27
    %p38 = scmp.eq.s32.totalorder %s18, 0
    %p39 = por %p37, %p38
    %p40 = scmp.ne.s32.totalorder %s26, %s27
    %p41 = scmp.eq.s32.totalorder %s19, 1
    %p42 = por %p40, %p41
    %p44 = scmp.ne.s32.totalorder %s27, %s43
    %p45 = scmp.eq.s32.totalorder %s19, 0
    %p46 = por %p44, %p45
    %s48 = sadd.s32 %s47, 1
    %p51 = scmp.eq.s32.totalorder %s13, 1
    %p52 = scmp.ne.s32.totalorder %s47, %s49
    %p53 = scmp.eq.s32.totalorder %s13, 0
    %p54 = por %p52, %p53
    %p55 = scmp.ne.s32.totalorder %s47, %s49
    %p56 = scmp.eq.s32.totalorder %s18, 1
    %p57 = por %p55, %p56
    %p58 = scmp.ne.s32.totalorder %s49, %s50
    %p59 = scmp.eq.s32.totalorder %s18, 0
    %p60 = por %p58, %p59
    %p61 = scmp.ne.s32.totalorder %s49, %s50
    %p62 = scmp.eq.s32.totalorder %s19, 1
    %p63 = por %p61, %p62
    %p65 = scmp.ne.s32.totalorder %s50, %s64
    %p66 = scmp.eq.s32.totalorder %s19, 0
    %p67 = por %p65, %p66
    %s69 = sadd.s32 %s68, 1
    %p72 = scmp.eq.s32.totalorder %s13, 1
    %p73 = scmp.ne.s32.totalorder %s68, %s70
    %p74 = scmp.eq.s32.totalorder %s13, 0
    %p75 = por %p73, %p74
    %p76 = scmp.ne.s32.totalorder %s68, %s70
    %p77 = scmp.eq.s32.totalorder %s18, 1
    %p78 = por %p76, %p77
    %p79 = scmp.ne.s32.totalorder %s70, %s71
    %p80 = scmp.eq.s32.totalorder %s18, 0
    %p81 = por %p79, %p80
    %p82 = scmp.ne.s32.totalorder %s70, %s71
    %p83 = scmp.eq.s32.totalorder %s19, 1
    %p84 = por %p82, %p83
    %p86 = scmp.ne.s32.totalorder %s71, %s85
    %p87 = scmp.eq.s32.totalorder %s19, 0
    %p88 = por %p86, %p87
    %s90 = sadd.s32 %s89, 1
    %p93 = scmp.eq.s32.totalorder %s13, 1
    %p94 = scmp.ne.s32.totalorder %s89, %s91
    %p95 = scmp.eq.s32.totalorder %s13, 0
    %p96 = por %p94, %p95
    %p97 = scmp.ne.s32.totalorder %s89, %s91
    %p98 = scmp.eq.s32.totalorder %s18, 1
    %p99 = por %p97, %p98
    %p100 = scmp.ne.s32.totalorder %s91, %s92
    %p101 = scmp.eq.s32.totalorder %s18, 0
    %p102 = por %p100, %p101
    %p103 = scmp.ne.s32.totalorder %s91, %s92
    %p104 = scmp.eq.s32.totalorder %s19, 1
    %p105 = por %p103, %p104
    %p107 = scmp.ne.s32.totalorder %s92, %s106
    %p108 = scmp.eq.s32.totalorder %s19, 0
    %p109 = por %p107, %p108
    %s111 = sadd.s32 %s110, 1
    %p114 = scmp.eq.s32.totalorder %s13, 1
    %p115 = scmp.ne.s32.totalorder %s110, %s112
    %p116 = scmp.eq.s32.totalorder %s13, 0
    %p117 = por %p115, %p116
    %p118 = scmp.ne.s32.totalorder %s110, %s112
    %p119 = scmp.eq.s32.totalorder %s18, 1
    %p120 = por %p118, %p119
    %p121 = scmp.ne.s32.totalorder %s112, %s113
    %p122 = scmp.eq.s32.totalorder %s18, 0
    %p123 = por %p121, %p122
    %p124 = scmp.ne.s32.totalorder %s112, %s113
    %p125 = scmp.eq.s32.totalorder %s19, 1
    %p126 = por %p124, %p125
    %p128 = scmp.ne.s32.totalorder %s113, %s127
    %p129 = scmp.eq.s32.totalorder %s19, 0
    %p130 = por %p128, %p129
    %s132 = sadd.s32 %s131, 1
    %p135 = scmp.eq.s32.totalorder %s13, 1
    %p136 = scmp.ne.s32.totalorder %s131, %s133
    %p137 = scmp.eq.s32.totalorder %s13, 0
    %p138 = por %p136, %p137
    %p139 = scmp.ne.s32.totalorder %s131, %s133
    %p140 = scmp.eq.s32.totalorder %s18, 1
    %p141 = por %p139, %p140
    %p142 = scmp.ne.s32.totalorder %s133, %s134
    %p143 = scmp.eq.s32.totalorder %s18, 0
    %p144 = por %p142, %p143
    %p145 = scmp.ne.s32.totalorder %s133, %s134
    %p146 = scmp.eq.s32.totalorder %s19, 1
    %p147 = por %p145, %p146
    %p149 = scmp.ne.s32.totalorder %s134, %s148
    %p150 = scmp.eq.s32.totalorder %s19, 0
    %p151 = por %p149, %p150
    %s153 = sadd.s32 %s152, 1
    %p156 = scmp.eq.s32.totalorder %s13, 1
    %p157 = scmp.ne.s32.totalorder %s152, %s154
    %p158 = scmp.eq.s32.totalorder %s13, 0
    %p159 = por %p157, %p158
    %p160 = scmp.ne.s32.totalorder %s152, %s154
    %p161 = scmp.eq.s32.totalorder %s18, 1
    %p162 = por %p160, %p161
    %p163 = scmp.ne.s32.totalorder %s154, %s155
    %p164 = scmp.eq.s32.totalorder %s18, 0
    %p165 = por %p163, %p164
    %p166 = scmp.ne.s32.totalorder %s154, %s155
    %p167 = scmp.eq.s32.totalorder %s19, 1
    %p168 = por %p166, %p167
    %p170 = scmp.ne.s32.totalorder %s155, %s169
    %p171 = scmp.eq.s32.totalorder %s19, 0
    %p172 = por %p170, %p171
    %s173 = ssub.s32 %s13, %s20
    %p174 = scmp.eq.s32.totalorder %s173, 0
    %s176 = sadd.s32 %s175, 1
    %s177 = scalar_select %p174, %s175, %s176
    %p180 = pneg %p174
    %p181 = scmp.eq.s32.totalorder %s13, 1
    %p182 = por %p180, %p181
    %p183 = scmp.ne.s32.totalorder %s175, %s178
    %p184 = scmp.eq.s32.totalorder %s13, 0
    %p185 = por %p183, %p184
    %p186 = scmp.ne.s32.totalorder %s175, %s178
    %p187 = scmp.eq.s32.totalorder %s18, 1
    %p188 = por %p186, %p187
    %p189 = scmp.ne.s32.totalorder %s178, %s179
    %p190 = scmp.eq.s32.totalorder %s18, 0
    %p191 = por %p189, %p190
    %p192 = scmp.ne.s32.totalorder %s178, %s179
    %p193 = scmp.eq.s32.totalorder %s19, 1
    %p194 = por %p192, %p193
    %p196 = scmp.ne.s32.totalorder %s179, %s195
    %p197 = scmp.eq.s32.totalorder %s19, 0
    %p198 = por %p196, %p197
    %p199 = scmp.le.s32.totalorder 1, %s13
    %p200 = scmp.lt.s32.totalorder %s13, 3
    %p201 = pnand %p199, %p200
    %p202 = pneg %p201
    // Predicated region
    $region9: #{submodel4_forward.1} parent=5 // pred_check
      _
    $region10: #{submodel4_forward.1} parent=5 // pred_check_branch
      %204 = sbr.rel (%p201) target = $region12
    $region11: #{submodel4_forward.1} parent=5 // pred_region
      %s205 = ssub.s32 %s13, 1
      // Predicated region
      $region13: #{submodel4_forward.1} parent=11 // pred_check
        %p206 = pneg %p60
      $region14: #{submodel4_forward.1} parent=11 // pred_check_branch
        %208 = sbr.rel (%p206) target = $region16
      $region15: #{submodel4_forward.1} parent=11 // pred_region
        _
      $region16: #{submodel4_forward.1} parent=11 // pred_fallthru
        _
      // Predicated region
      $region17: #{submodel4_forward.1} parent=11 // pred_check
        %p209 = pneg %p81
      $region18: #{submodel4_forward.1} parent=11 // pred_check_branch
        %211 = sbr.rel (%p209) target = $region20
      $region19: #{submodel4_forward.1} parent=11 // pred_region
        _
      $region20: #{submodel4_forward.1} parent=11 // pred_fallthru
        _
      // Predicated region
      $region21: #{submodel4_forward.1} parent=11 // pred_check
        %p212 = pneg %p102
      $region22: #{submodel4_forward.1} parent=11 // pred_check_branch
        %214 = sbr.rel (%p212) target = $region24
      $region23: #{submodel4_forward.1} parent=11 // pred_region
        _
      $region24: #{submodel4_forward.1} parent=11 // pred_fallthru
        _
      // Predicated region
      $region25: #{submodel4_forward.1} parent=11 // pred_check
        %p215 = pneg %p123
      $region26: #{submodel4_forward.1} parent=11 // pred_check_branch
        %217 = sbr.rel (%p215) target = $region28
      $region27: #{submodel4_forward.1} parent=11 // pred_region
        _
      $region28: #{submodel4_forward.1} parent=11 // pred_fallthru
        _
      // Predicated region
      $region29: #{submodel4_forward.1} parent=11 // pred_check
        %p218 = pneg %p144
      $region30: #{submodel4_forward.1} parent=11 // pred_check_branch
        %220 = sbr.rel (%p218) target = $region32
      $region31: #{submodel4_forward.1} parent=11 // pred_region
        _
      $region32: #{submodel4_forward.1} parent=11 // pred_fallthru
        _
      // Predicated region
      $region33: #{submodel4_forward.1} parent=11 // pred_check
        %p221 = pneg %p165
      $region34: #{submodel4_forward.1} parent=11 // pred_check_branch
        %223 = sbr.rel (%p221) target = $region36
      $region35: #{submodel4_forward.1} parent=11 // pred_region
        _
      $region36: #{submodel4_forward.1} parent=11 // pred_fallthru
        _
    $region12: #{submodel4_forward.1} parent=5 // pred_fallthru
      _
    %p224 = scmp.lt.s32.totalorder %s13, 2
    // Predicated region
    $region37: #{submodel4_forward.1} parent=5 // pred_check
      %p225 = pneg %p224
    $region38: #{submodel4_forward.1} parent=5 // pred_check_branch
      %227 = sbr.rel (%p225) target = $region40
    $region39: #{submodel4_forward.1} parent=5 // pred_region
      // Predicated region
      $region41: #{submodel4_forward.1} parent=39 // pred_check
        %p228 = pneg %p33
      $region42: #{submodel4_forward.1} parent=39 // pred_check_branch
        %230 = sbr.rel (%p228) target = $region44
      $region43: #{submodel4_forward.1} parent=39 // pred_region
        %p231 = scmp.lt.s32.totalorder %s13, 1
        %s232 = scalar_select %p231, %s13, 1
        %s233 = smul.addr %s232, 10
        %s234 = smul.addr %s233, 4
        %s235 = scalar_lea.vmem %s0, %s234
      $region44: #{submodel4_forward.1} parent=39 // pred_fallthru
        _
    $region40: #{submodel4_forward.1} parent=5 // pred_fallthru
      _
    %p236 = scmp.le.s32.totalorder 1, %s13
    %p237 = scmp.lt.s32.totalorder %s13, 3
    %p238 = pnand %p236, %p237
    %p239 = pneg %p238
    // Predicated region
    $region45: #{submodel4_forward.1} parent=5 // pred_check
      _
    $region46: #{submodel4_forward.1} parent=5 // pred_check_branch
      %241 = sbr.rel (%p238) target = $region48
    $region47: #{submodel4_forward.1} parent=5 // pred_region
      %s242 = ssub.s32 %s13, 1
      %p243 = scmp.lt.s32.totalorder %s18, 1
      %s244 = scalar_select %p243, %s18, 1
      %s245 = smul.addr %s244, 10
      %s246 = smul.addr %s245, 4
      %s247 = scalar_lea.vmem %s0, %s246
      %p248 = pneg %p39
      %p249 = pneg %p36
      %p250 = pneg %p60
      %p251 = pneg %p57
      %p252 = pneg %p81
      %p253 = pneg %p78
      %p254 = pneg %p102
      %p255 = pneg %p99
      %p256 = pneg %p123
      %p257 = pneg %p120
      %p258 = pneg %p144
      %p259 = pneg %p141
      %p260 = pneg %p165
      %p261 = pneg %p162
      %p262 = pneg %p191
      %p263 = pneg %p188
      %p264 = scmp.lt.s32.totalorder %s18, 1
      %s265 = scalar_select %p264, %s18, 1
      %s266 = smul.addr %s265, 6
      %s267 = smul.addr %s266, 8
      %s268 = scalar_lea.vmem %s7, %s267
      %p269 = scmp.lt.s32.totalorder %s18, 1
      %s270 = scalar_select %p269, %s18, 1
      %s271 = smul.addr %s270, 10
      %s272 = smul.addr %s271, 4
      %s273 = scalar_lea.vmem %s0, %s272
      %p274 = scmp.lt.s32.totalorder %s18, 1
      %s275 = scalar_select %p274, %s18, 1
      %s276 = smul.addr %s275, 6
      %s277 = smul.addr %s276, 8
      %s278 = scalar_lea.vmem %s7, %s277
      %v280 = vld [vmem:[%s1] sm:$0xf]
      %v281 = vld [vmem:[%s1 + $0x4] sm:$0xf]
      %v282 = vld [vmem:[%s1 + $0x8] sm:$0xf]
      %v283 = vld [vmem:[%s1 + $0xc] sm:$0xf]
      %v284 = vld [vmem:[%s273] sm:$0xff]
      %v285 = vld [vmem:[%s273 + $0x8] sm:$0xff]
      %v286 = vld [vmem:[%s273 + $0x10] sm:$0xff]
      %v287 = vld [vmem:[%s273 + $0x18] sm:$0xff]
      %v288 = vld [vmem:[%s273 + $0x20] sm:$0xff]
      %v289 = vld [vmem:[%s2] sm:$0xff]
      %v290 = vld [vmem:[%s2 + $0x8] sm:$0xff]
      %v291 = vld [vmem:[%s2 + $0x10] sm:$0xff]
      %v292 = vld [vmem:[%s2 + $0x18] sm:$0xff]
      %294 = vset.pattern.permute.xlu0 0
      %295 = vperm.xlu0 %294, %v289
      %v296 = vpop.permute.xlu0 %295
      %299 = vset.pattern.permute.xlu0 0
      %300 = vperm.xlu0 %299, %v290
      %v301 = vpop.permute.xlu0 %300
      %304 = vset.pattern.permute.xlu0 0
      %305 = vperm.xlu0 %304, %v291
      %v306 = vpop.permute.xlu0 %305
      %309 = vset.pattern.permute.xlu0 0
      %310 = vperm.xlu0 %309, %v292
      %v311 = vpop.permute.xlu0 %310
      %v317 = vunpack.c.l.b16 %v280
      %v318 = vunpack.c.l.b16 %v281
      %v319 = vunpack.c.l.b16 %v282
      %v320 = vunpack.c.l.b16 %v283
      %v321 = vpack.c.b16 %v318, %v317
      %v322 = vpack.c.b16 %v320, %v319
      %v328 = vunpack.c.l.b16 %v284
      %v329 = vunpack.c.h.b16 %v284
      %v330 = vunpack.c.l.b16 %v285
      %v331 = vunpack.c.h.b16 %v285
      %v332 = vunpack.c.l.b16 %v286
      %v333 = vunpack.c.h.b16 %v286
      %v334 = vunpack.c.l.b16 %v287
      %v335 = vunpack.c.h.b16 %v287
      %v336 = vunpack.c.l.b16 %v288
      %v337 = vunpack.c.h.b16 %v288
      %v338 = vpack.c.b16 %v330, %v328
      %v339 = vpack.c.b16 %v331, %v329
      %v340 = vpack.c.b16 %v334, %v332
      %v341 = vpack.c.b16 %v335, %v333
      %v342 = vpack.c.b16 %v336, %v336
      %v343 = vpack.c.b16 %v337, %v337
      %vm348 = vcmask 326656
      %v350 = vsel %vm348, %v321, 0
      %v353 = vsel %vm348, %v322, 0
      %vm355 = vcmask 1043456
      %v357 = vsel %vm355, %v342, 0
      %v360 = vsel %vm355, %v343, 0
      %362 = vmatprep.subr.bf16.mxu0 %v339
      %363 = vmatpush1.bf16.msra.mxu0 %v338
      %364 = vmatprep.subr.bf16.mxu0 %v341
      %365 = vmatpush1.bf16.msra.mxu0 %v340
      %366 = vmatprep.subr.bf16.mxu0 %v360
      %367 = vmatpush1.bf16.msra.mxu0 %v357
      %368 = vmatprep.subr.bf16.mxu0 0
      %369 = vmatpush1.bf16.msra.mxu0 0
      %370 = vmatprep.subr.bf16.mxu0 0
      %371 = vmatpush1.bf16.msra.mxu0 0
      %372 = vmatprep.subr.bf16.mxu0 0
      %373 = vmatpush1.bf16.msra.mxu0 0
      %374 = vmatprep.subr.bf16.mxu0 0
      %375 = vmatpush1.bf16.msra.mxu0 0
      %376 = vmatprep.subr.bf16.mxu0 0
      %377 = vmatpush1.bf16.msra.mxu0 0
      %378 = vmatprep.subr.bf16.mxu0 0
      %379 = vmatpush1.bf16.msra.mxu0 0
      %380 = vmatprep.subr.bf16.mxu0 0
      %381 = vmatpush1.bf16.msra.mxu0 0
      %382 = vmatprep.subr.bf16.mxu0 0
      %383 = vmatpush1.bf16.msra.mxu0 0
      %384 = vmatprep.subr.bf16.mxu0 0
      %385 = vmatpush1.bf16.msra.mxu0 0
      %386 = vmatprep.subr.bf16.mxu0 0
      %387 = vmatpush1.bf16.msra.mxu0 0
      %388 = vmatprep.subr.bf16.mxu0 0
      %389 = vmatpush1.bf16.msra.mxu0 0
      %390 = vmatprep.subr.bf16.mxu0 0
      %391 = vmatpush1.bf16.msra.mxu0 0
      %392 = vmatprep.subr.bf16.mxu0 0
      %393 = vmatpush1.bf16.msra.mxu0 0
      %394 = vmatprep.mubr.bf16.mxu0 0
      %395 = vmatmul.mubr.bf16.gmra.mrb[0].mxu0 %v350
      %v396 = vpop.f32.mrb[0].mxu0
      %v397 = vadd.f32 %v296, %v396
      %v398 = vpop.f32.mrb[0].mxu0
      %v399 = vadd.f32 %v296, %v398
      %v400 = vpop.f32.mrb[0].mxu0
      %v401 = vadd.f32 %v301, %v400
      %v402 = vpop.f32.mrb[0].mxu0
      %v403 = vadd.f32 %v301, %v402
      %404 = vmatprep.mubr.bf16.mxu0 0
      %405 = vmatmul.mubr.bf16.gmra.mrb[0].mxu0 %v353
      %v406 = vpop.f32.mrb[0].mxu0
      %v407 = vadd.f32 %v306, %v406
      %v408 = vpop.f32.mrb[0].mxu0
      %v409 = vadd.f32 %v306, %v408
      %v410 = vpop.f32.mrb[0].mxu0
      %v411 = vadd.f32 %v311, %v410
      %v412 = vpop.f32.mrb[0].mxu0
      %v413 = vadd.f32 %v311, %v412
      %414 = vdwg.mxu0
      %v415 = vmax.f32 %v397, 0.0
      %v416 = vmax.f32 %v399, 0.0
      %v417 = vmax.f32 %v401, 0.0
      %v418 = vmax.f32 %v403, 0.0
      %v419 = vmax.f32 %v407, 0.0
      %v420 = vmax.f32 %v409, 0.0
      %v421 = vmax.f32 %v411, 0.0
      %v422 = vmax.f32 %v413, 0.0
      %v423 = vlaneseq
      %v424 = vand.u32 %v423, 127
      %v425 = vadd.s32 %v424, 128
      %vm426 = vcmp.lt.s32.totalorder %v424, 0
      %v427 = vsub.s32 0, %v424
      %v428 = vsel %vm426, %v427, %v424
      %v429 = vshrl.u32 %v428, 4
      %v430 = vand.u32 %v428, 15
      %v431 = vsub.s32 0, %v430
      %v432 = vsel %vm426, %v431, %v430
      %vm433 = vcmp.lt.s32.totalorder %v425, 0
      %v434 = vsub.s32 0, %v425
      %v435 = vsel %vm433, %v434, %v425
      %v436 = vshrl.u32 %v435, 4
      %v437 = vand.u32 %v435, 15
      %v438 = vsub.s32 0, %v437
      %v439 = vsel %vm433, %v438, %v437
      %vm440 = vcmp.ne.s32.totalorder %v432, 0
      %vm441 = vcmp.ne.s32.totalorder %v439, 0
      %vm442 = vcmp.lt.s32.totalorder %v432, 0
      %vm443 = vcmp.lt.s32.totalorder %v439, 0
      %vm444 = vmand %vm442, %vm440
      %vm445 = vmand %vm443, %vm441
      %v446 = vadd.s32 %v432, 16
      %v447 = vadd.s32 %v439, 16
      %v448 = vsel %vm444, %v446, %v432
      %v449 = vsel %vm445, %v447, %v439
      %vm450 = vcmp.lt.s32.totalorder %v424, 16
      %vm451 = vcmp.lt.s32.totalorder %v425, 16
      %vm452 = vcmp.ge.s32.totalorder %v424, 240
      %vm453 = vcmp.ge.s32.totalorder %v425, 240
      %vm454 = vcmp.eq.s32.totalorder %v448, 0
      %vm455 = vcmp.eq.s32.totalorder %v449, 0
      %vm456 = vcmp.eq.s32.totalorder %v448, 15
      %vm457 = vcmp.eq.s32.totalorder %v449, 15
      %458 = vrot.lane.b32.xlu0 %v415, 16
      %v459 = vpop.permute.xlu0 %458
      %460 = vrot.lane.b32.xlu0 %v417, 16
      %v461 = vpop.permute.xlu0 %460
      %462 = vrot.lane.b32.xlu0 %v419, 16
      %v463 = vpop.permute.xlu0 %462
      %464 = vrot.lane.b32.xlu0 %v421, 16
      %v465 = vpop.permute.xlu0 %464
      %466 = vrot.lane.b32.xlu0 %v416, 16
      %v467 = vpop.permute.xlu0 %466
      %468 = vrot.lane.b32.xlu0 %v418, 16
      %v469 = vpop.permute.xlu0 %468
      %470 = vrot.lane.b32.xlu0 %v420, 16
      %v471 = vpop.permute.xlu0 %470
      %472 = vrot.lane.b32.xlu0 %v422, 16
      %v473 = vpop.permute.xlu0 %472
      %v474 = vsel %vm450, %v459, %v467
      %v475 = vsel %vm450, %v461, %v469
      %v476 = vsel %vm450, %v463, %v471
      %v477 = vsel %vm450, %v465, %v473
      %v478 = vsel %vm450, %v467, %v459
      %v479 = vsel %vm450, %v469, %v461
      %v480 = vsel %vm450, %v471, %v463
      %v481 = vsel %vm450, %v473, %v465
      %v482 = vsel %vm450, 1, 0
      %v483 = vsel %vm451, 1, 0
      %vm484 = vcmp.eq.s32.totalorder %v482, 1
      %vm485 = vcmp.eq.s32.totalorder %v483, 1
      %v486 = vsel %vm484, %v415, %v478
      %v487 = vsel %vm485, %v416, %v474
      %v488 = vsel %vm484, %v417, %v479
      %v489 = vsel %vm485, %v418, %v475
      %v490 = vsel %vm484, %v419, %v480
      %v491 = vsel %vm485, %v420, %v476
      %v492 = vsel %vm484, %v421, %v481
      %v493 = vsel %vm485, %v422, %v477
      %494 = vrot.lane.b32.xlu0 %v415, 112
      %v495 = vpop.permute.xlu0 %494
      %496 = vrot.lane.b32.xlu0 %v417, 112
      %v497 = vpop.permute.xlu0 %496
      %498 = vrot.lane.b32.xlu0 %v419, 112
      %v499 = vpop.permute.xlu0 %498
      %500 = vrot.lane.b32.xlu0 %v421, 112
      %v501 = vpop.permute.xlu0 %500
      %502 = vrot.lane.b32.xlu0 %v416, 112
      %v503 = vpop.permute.xlu0 %502
      %504 = vrot.lane.b32.xlu0 %v418, 112
      %v505 = vpop.permute.xlu0 %504
      %506 = vrot.lane.b32.xlu0 %v420, 112
      %v507 = vpop.permute.xlu0 %506
      %508 = vrot.lane.b32.xlu0 %v422, 112
      %v509 = vpop.permute.xlu0 %508
      %vm510 = vcmp.lt.s32.totalorder %v424, 112
      %v511 = vsel %vm510, %v495, %v503
      %v512 = vsel %vm510, %v497, %v505
      %v513 = vsel %vm510, %v499, %v507
      %v514 = vsel %vm510, %v501, %v509
      %v515 = vsel %vm510, %v503, %v495
      %v516 = vsel %vm510, %v505, %v497
      %v517 = vsel %vm510, %v507, %v499
      %v518 = vsel %vm510, %v509, %v501
      %v519 = vsel %vm452, 1, 0
      %v520 = vsel %vm453, 1, 0
      %vm521 = vcmp.eq.s32.totalorder %v519, 1
      %vm522 = vcmp.eq.s32.totalorder %v520, 1
      %v523 = vsel %vm521, %v415, %v511
      %v524 = vsel %vm522, %v416, %v515
      %v525 = vsel %vm521, %v417, %v512
      %v526 = vsel %vm522, %v418, %v516
      %v527 = vsel %vm521, %v419, %v513
      %v528 = vsel %vm522, %v420, %v517
      %v529 = vsel %vm521, %v421, %v514
      %v530 = vsel %vm522, %v422, %v518
      %531 = vrot.lane.b32.xlu0 %v486, 1
      %v532 = vpop.permute.xlu0 %531
      %533 = vrot.lane.b32.xlu0 %v488, 1
      %v534 = vpop.permute.xlu0 %533
      %535 = vrot.lane.b32.xlu0 %v490, 1
      %v536 = vpop.permute.xlu0 %535
      %537 = vrot.lane.b32.xlu0 %v492, 1
      %v538 = vpop.permute.xlu0 %537
      %539 = vrot.lane.b32.xlu0 %v487, 1
      %v540 = vpop.permute.xlu0 %539
      %541 = vrot.lane.b32.xlu0 %v489, 1
      %v542 = vpop.permute.xlu0 %541
      %543 = vrot.lane.b32.xlu0 %v491, 1
      %v544 = vpop.permute.xlu0 %543
      %545 = vrot.lane.b32.xlu0 %v493, 1
      %v546 = vpop.permute.xlu0 %545
      %vm547 = vcmp.lt.s32.totalorder %v424, 1
      %v548 = vsel %vm547, %v532, %v540
      %v549 = vsel %vm547, %v534, %v542
      %v550 = vsel %vm547, %v536, %v544
      %v551 = vsel %vm547, %v538, %v546
      %v552 = vsel %vm547, %v540, %v532
      %v553 = vsel %vm547, %v542, %v534
      %v554 = vsel %vm547, %v544, %v536
      %v555 = vsel %vm547, %v546, %v538
      %v556 = vsel %vm454, 1, 0
      %v557 = vsel %vm455, 1, 0
      %vm558 = vcmp.eq.s32.totalorder %v556, 1
      %vm559 = vcmp.eq.s32.totalorder %v557, 1
      %v560 = vsel %vm558, %v486, %v552
      %v561 = vsel %vm559, %v487, %v548
      %v562 = vsel %vm558, %v488, %v553
      %v563 = vsel %vm559, %v489, %v549
      %v564 = vsel %vm558, %v490, %v554
      %v565 = vsel %vm559, %v491, %v550
      %v566 = vsel %vm558, %v492, %v555
      %v567 = vsel %vm559, %v493, %v551
      %v568 = vpack.c.bf16 %v562, %v560
      %v569 = vpack.c.bf16 %v563, %v561
      %v570 = vpack.c.bf16 %v566, %v564
      %v571 = vpack.c.bf16 %v567, %v565
      %v572 = vld [vmem:[%s3] sm:$0xf]
      %v573 = vld [vmem:[%s3 + $0x4] sm:$0xf]
      %v574 = vld [vmem:[%s3 + $0x8] sm:$0x3]
      %v575 = vpack.c.bf16 %v488, %v486
      %v576 = vpack.c.bf16 %v489, %v487
      %v577 = vpack.c.bf16 %v492, %v490
      %v578 = vpack.c.bf16 %v493, %v491
      %s579 = scalar_lea.vmem %s3, 12
      %v580 = vld [vmem:[%s579] sm:$0xf]
      %v581 = vld [vmem:[%s579 + $0x4] sm:$0xf]
      %v582 = vld [vmem:[%s579 + $0x8] sm:$0x3]
      %v586 = vunpack.c.l.b16 %v580
      %v587 = vunpack.c.l.b16 %v581
      %v588 = vunpack.c.l.b16 %v582
      %v589 = vpack.c.b16 %v587, %v586
      %v590 = vpack.c.b16 %v588, %v588
      %vm591 = vcmask 261120
      %v593 = vsel %vm591, %v589, 0
      %v596 = vsel %vm591, %v590, 0
      %598 = vmatprep.subr.bf16.mxu0 %v576
      %599 = vmatpush1.bf16.msra.mxu0 %v575
      %600 = vmatprep.subr.bf16.mxu0 %v578
      %601 = vmatpush1.bf16.msra.mxu0 %v577
      %602 = vmatprep.subr.bf16.mxu0 0
      %603 = vmatpush1.bf16.msra.mxu0 0
      %604 = vmatprep.subr.bf16.mxu0 0
      %605 = vmatpush1.bf16.msra.mxu0 0
      %606 = vmatprep.subr.bf16.mxu0 0
      %607 = vmatpush1.bf16.msra.mxu0 0
      %608 = vmatprep.subr.bf16.mxu0 0
      %609 = vmatpush1.bf16.msra.mxu0 0
      %610 = vmatprep.subr.bf16.mxu0 0
      %611 = vmatpush1.bf16.msra.mxu0 0
      %612 = vmatprep.subr.bf16.mxu0 0
      %613 = vmatpush1.bf16.msra.mxu0 0
      %614 = vmatprep.subr.bf16.mxu0 0
      %615 = vmatpush1.bf16.msra.mxu0 0
      %616 = vmatprep.subr.bf16.mxu0 0
      %617 = vmatpush1.bf16.msra.mxu0 0
      %618 = vmatprep.subr.bf16.mxu0 0
      %619 = vmatpush1.bf16.msra.mxu0 0
      %620 = vmatprep.subr.bf16.mxu0 0
      %621 = vmatpush1.bf16.msra.mxu0 0
      %622 = vmatprep.subr.bf16.mxu0 0
      %623 = vmatpush1.bf16.msra.mxu0 0
      %624 = vmatprep.subr.bf16.mxu0 0
      %625 = vmatpush1.bf16.msra.mxu0 0
      %626 = vmatprep.subr.bf16.mxu0 0
      %627 = vmatpush1.bf16.msra.mxu0 0
      %628 = vmatprep.subr.bf16.mxu0 0
      %629 = vmatpush1.bf16.msra.mxu0 0
      %630 = vmatprep.mubr.bf16.mxu0 0
      %631 = vmatmul.mubr.bf16.gmra.mrb[0].mxu0 %v593
      %v632 = vpop.f32.mrb[0].mxu0
      %v633 = vadd.f32 0.0, %v632
      %v634 = vpop.f32.mrb[0].mxu0
      %v635 = vadd.f32 0.0, %v634
      %v636 = vpop.f32.mrb[0].mxu0
      %v637 = vadd.f32 0.0, %v636
      %v638 = vpop.f32.mrb[0].mxu0
      %v639 = vadd.f32 0.0, %v638
      %640 = vmatprep.mubr.bf16.mxu0 0
      %641 = vmatmul.mubr.bf16.gmra.mrb[0].mxu0 %v596
      %v642 = vpop.f32.mrb[0].mxu0
      %v643 = vadd.f32 0.0, %v642
      %v644 = vpop.f32.mrb[0].mxu0
      %v645 = vadd.f32 0.0, %v644
      %v646 = vpop.f32.mrb[0].mxu0
      %v647 = vpop.f32.mrb[0].mxu0
      %648 = vdwg.mxu0
      %v652 = vunpack.c.l.b16 %v572
      %v653 = vunpack.c.l.b16 %v573
      %v654 = vunpack.c.l.b16 %v574
      %v655 = vpack.c.b16 %v653, %v652
      %v656 = vpack.c.b16 %v654, %v654
      %v658 = vsel %vm591, %v655, 0
      %v661 = vsel %vm591, %v656, 0
      %663 = vmatprep.subr.bf16.mxu0 %v569
      %664 = vmatpush1.bf16.msra.mxu0 %v568
      %665 = vmatprep.subr.bf16.mxu0 %v571
      %666 = vmatpush1.bf16.msra.mxu0 %v570
      %667 = vmatprep.subr.bf16.mxu0 0
      %668 = vmatpush1.bf16.msra.mxu0 0
      %669 = vmatprep.subr.bf16.mxu0 0
      %670 = vmatpush1.bf16.msra.mxu0 0
      %671 = vmatprep.subr.bf16.mxu0 0
      %672 = vmatpush1.bf16.msra.mxu0 0
      %673 = vmatprep.subr.bf16.mxu0 0
      %674 = vmatpush1.bf16.msra.mxu0 0
      %675 = vmatprep.subr.bf16.mxu0 0
      %676 = vmatpush1.bf16.msra.mxu0 0
      %677 = vmatprep.subr.bf16.mxu0 0
      %678 = vmatpush1.bf16.msra.mxu0 0
      %679 = vmatprep.subr.bf16.mxu0 0
      %680 = vmatpush1.bf16.msra.mxu0 0
      %681 = vmatprep.subr.bf16.mxu0 0
      %682 = vmatpush1.bf16.msra.mxu0 0
      %683 = vmatprep.subr.bf16.mxu0 0
      %684 = vmatpush1.bf16.msra.mxu0 0
      %685 = vmatprep.subr.bf16.mxu0 0
      %686 = vmatpush1.bf16.msra.mxu0 0
      %687 = vmatprep.subr.bf16.mxu0 0
      %688 = vmatpush1.bf16.msra.mxu0 0
      %689 = vmatprep.subr.bf16.mxu0 0
      %690 = vmatpush1.bf16.msra.mxu0 0
      %691 = vmatprep.subr.bf16.mxu0 0
      %692 = vmatpush1.bf16.msra.mxu0 0
      %693 = vmatprep.subr.bf16.mxu0 0
      %694 = vmatpush1.bf16.msra.mxu0 0
      %695 = vmatprep.mubr.bf16.mxu0 0
      %696 = vmatmul.mubr.bf16.gmra.mrb[0].mxu0 %v658
      %v697 = vpop.f32.mrb[0].mxu0
      %v698 = vadd.f32 %v633, %v697
      %v699 = vpop.f32.mrb[0].mxu0
      %v700 = vadd.f32 %v635, %v699
      %v701 = vpop.f32.mrb[0].mxu0
      %v702 = vadd.f32 %v637, %v701
      %v703 = vpop.f32.mrb[0].mxu0
      %v704 = vadd.f32 %v639, %v703
      %705 = vmatprep.mubr.bf16.mxu0 0
      %706 = vmatmul.mubr.bf16.gmra.mrb[0].mxu0 %v661
      %v707 = vpop.f32.mrb[0].mxu0
      %v708 = vadd.f32 %v643, %v707
      %v709 = vpop.f32.mrb[0].mxu0
      %v710 = vadd.f32 %v645, %v709
      %v711 = vpop.f32.mrb[0].mxu0
      %v712 = vpop.f32.mrb[0].mxu0
      %713 = vdwg.mxu0
      %714 = vrot.lane.b32.xlu0 %v486, 127
      %v715 = vpop.permute.xlu0 %714
      %716 = vrot.lane.b32.xlu0 %v488, 127
      %v717 = vpop.permute.xlu0 %716
      %718 = vrot.lane.b32.xlu0 %v490, 127
      %v719 = vpop.permute.xlu0 %718
      %720 = vrot.lane.b32.xlu0 %v492, 127
      %v721 = vpop.permute.xlu0 %720
      %722 = vrot.lane.b32.xlu0 %v487, 127
      %v723 = vpop.permute.xlu0 %722
      %724 = vrot.lane.b32.xlu0 %v489, 127
      %v725 = vpop.permute.xlu0 %724
      %726 = vrot.lane.b32.xlu0 %v491, 127
      %v727 = vpop.permute.xlu0 %726
      %728 = vrot.lane.b32.xlu0 %v493, 127
      %v729 = vpop.permute.xlu0 %728
      %vm730 = vcmp.lt.s32.totalorder %v424, 127
      %v731 = vsel %vm730, %v715, %v723
      %v732 = vsel %vm730, %v717, %v725
      %v733 = vsel %vm730, %v719, %v727
      %v734 = vsel %vm730, %v721, %v729
      %v735 = vsel %vm730, %v723, %v715
      %v736 = vsel %vm730, %v725, %v717
      %v737 = vsel %vm730, %v727, %v719
      %v738 = vsel %vm730, %v729, %v721
      %v739 = vsel %vm456, 1, 0
      %v740 = vsel %vm457, 1, 0
      %vm741 = vcmp.eq.s32.totalorder %v739, 1
      %vm742 = vcmp.eq.s32.totalorder %v740, 1
      %v743 = vsel %vm741, %v486, %v731
      %v744 = vsel %vm742, %v487, %v735
      %v745 = vsel %vm741, %v488, %v732
      %v746 = vsel %vm742, %v489, %v736
      %v747 = vsel %vm741, %v490, %v733
      %v748 = vsel %vm742, %v491, %v737
      %v749 = vsel %vm741, %v492, %v734
      %v750 = vsel %vm742, %v493, %v738
      %v751 = vpack.c.bf16 %v745, %v743
      %v752 = vpack.c.bf16 %v746, %v744
      %v753 = vpack.c.bf16 %v749, %v747
      %v754 = vpack.c.bf16 %v750, %v748
      %s755 = scalar_lea.vmem %s3, 24
      %v756 = vld [vmem:[%s755] sm:$0xf]
      %v757 = vld [vmem:[%s755 + $0x4] sm:$0xf]
      %v758 = vld [vmem:[%s755 + $0x8] sm:$0x3]
      %v762 = vunpack.c.l.b16 %v756
      %v763 = vunpack.c.l.b16 %v757
      %v764 = vunpack.c.l.b16 %v758
      %v765 = vpack.c.b16 %v763, %v762
      %v766 = vpack.c.b16 %v764, %v764
      %v768 = vsel %vm591, %v765, 0
      %v771 = vsel %vm591, %v766, 0
      %773 = vmatprep.subr.bf16.mxu0 %v752
      %774 = vmatpush1.bf16.msra.mxu0 %v751
      %775 = vmatprep.subr.bf16.mxu0 %v754
      %776 = vmatpush1.bf16.msra.mxu0 %v753
      %777 = vmatprep.subr.bf16.mxu0 0
      %778 = vmatpush1.bf16.msra.mxu0 0
      %779 = vmatprep.subr.bf16.mxu0 0
      %780 = vmatpush1.bf16.msra.mxu0 0
      %781 = vmatprep.subr.bf16.mxu0 0
      %782 = vmatpush1.bf16.msra.mxu0 0
      %783 = vmatprep.subr.bf16.mxu0 0
      %784 = vmatpush1.bf16.msra.mxu0 0
      %785 = vmatprep.subr.bf16.mxu0 0
      %786 = vmatpush1.bf16.msra.mxu0 0
      %787 = vmatprep.subr.bf16.mxu0 0
      %788 = vmatpush1.bf16.msra.mxu0 0
      %789 = vmatprep.subr.bf16.mxu0 0
      %790 = vmatpush1.bf16.msra.mxu0 0
      %791 = vmatprep.subr.bf16.mxu0 0
      %792 = vmatpush1.bf16.msra.mxu0 0
      %793 = vmatprep.subr.bf16.mxu0 0
      %794 = vmatpush1.bf16.msra.mxu0 0
      %795 = vmatprep.subr.bf16.mxu0 0
      %796 = vmatpush1.bf16.msra.mxu0 0
      %797 = vmatprep.subr.bf16.mxu0 0
      %798 = vmatpush1.bf16.msra.mxu0 0
      %799 = vmatprep.subr.bf16.mxu0 0
      %800 = vmatpush1.bf16.msra.mxu0 0
      %801 = vmatprep.subr.bf16.mxu0 0
      %802 = vmatpush1.bf16.msra.mxu0 0
      %803 = vmatprep.subr.bf16.mxu0 0
      %804 = vmatpush1.bf16.msra.mxu0 0
      %805 = vmatprep.mubr.bf16.mxu0 0
      %806 = vmatmul.mubr.bf16.gmra.mrb[0].mxu0 %v768
      %v807 = vpop.f32.mrb[0].mxu0
      %v808 = vadd.f32 0.0, %v807
      %v809 = vpop.f32.mrb[0].mxu0
      %v810 = vadd.f32 0.0, %v809
      %v811 = vpop.f32.mrb[0].mxu0
      %v812 = vadd.f32 0.0, %v811
      %v813 = vpop.f32.mrb[0].mxu0
      %v814 = vadd.f32 0.0, %v813
      %815 = vmatprep.mubr.bf16.mxu0 0
      %816 = vmatmul.mubr.bf16.gmra.mrb[0].mxu0 %v771
      %v817 = vpop.f32.mrb[0].mxu0
      %v818 = vadd.f32 0.0, %v817
      %v819 = vpop.f32.mrb[0].mxu0
      %v820 = vadd.f32 0.0, %v819
      %v821 = vpop.f32.mrb[0].mxu0
      %v822 = vpop.f32.mrb[0].mxu0
      %823 = vdwg.mxu0
      %v824 = vadd.f32 %v698, %v808
      %v825 = vadd.f32 %v700, %v810
      %v826 = vadd.f32 %v702, %v812
      %v827 = vadd.f32 %v704, %v814
      %v828 = vadd.f32 %v708, %v818
      %v829 = vadd.f32 %v710, %v820
      %830 = vrot.lane.b32.xlu0 %v415, 1
      %v831 = vpop.permute.xlu0 %830
      %832 = vrot.lane.b32.xlu0 %v417, 1
      %v833 = vpop.permute.xlu0 %832
      %834 = vrot.lane.b32.xlu0 %v419, 1
      %v835 = vpop.permute.xlu0 %834
      %836 = vrot.lane.b32.xlu0 %v421, 1
      %v837 = vpop.permute.xlu0 %836
      %838 = vrot.lane.b32.xlu0 %v416, 1
      %v839 = vpop.permute.xlu0 %838
      %840 = vrot.lane.b32.xlu0 %v418, 1
      %v841 = vpop.permute.xlu0 %840
      %842 = vrot.lane.b32.xlu0 %v420, 1
      %v843 = vpop.permute.xlu0 %842
      %844 = vrot.lane.b32.xlu0 %v422, 1
      %v845 = vpop.permute.xlu0 %844
      %v846 = vsel %vm547, %v831, %v839
      %v847 = vsel %vm547, %v833, %v841
      %v848 = vsel %vm547, %v835, %v843
      %v849 = vsel %vm547, %v837, %v845
      %v850 = vsel %vm547, %v839, %v831
      %v851 = vsel %vm547, %v841, %v833
      %v852 = vsel %vm547, %v843, %v835
      %v853 = vsel %vm547, %v845, %v837
      %v854 = vsel %vm558, %v415, %v850
      %v855 = vsel %vm559, %v416, %v846
      %v856 = vsel %vm558, %v417, %v851
      %v857 = vsel %vm559, %v418, %v847
      %v858 = vsel %vm558, %v419, %v852
      %v859 = vsel %vm559, %v420, %v848
      %v860 = vsel %vm558, %v421, %v853
      %v861 = vsel %vm559, %v422, %v849
      %v862 = vpack.c.bf16 %v856, %v854
      %v863 = vpack.c.bf16 %v857, %v855
      %v864 = vpack.c.bf16 %v860, %v858
      %v865 = vpack.c.bf16 %v861, %v859
      %s866 = scalar_lea.vmem %s3, 36
      %v867 = vld [vmem:[%s866] sm:$0xf]
      %v868 = vld [vmem:[%s866 + $0x4] sm:$0xf]
      %v869 = vld [vmem:[%s866 + $0x8] sm:$0x3]
      %v873 = vunpack.c.l.b16 %v867
      %v874 = vunpack.c.l.b16 %v868
      %v875 = vunpack.c.l.b16 %v869
      %v876 = vpack.c.b16 %v874, %v873
      %v877 = vpack.c.b16 %v875, %v875
      %v879 = vsel %vm591, %v876, 0
      %v882 = vsel %vm591, %v877, 0
      %884 = vmatprep.subr.bf16.mxu0 %v863
      %885 = vmatpush1.bf16.msra.mxu0 %v862
      %886 = vmatprep.subr.bf16.mxu0 %v865
      %887 = vmatpush1.bf16.msra.mxu0 %v864
      %888 = vmatprep.subr.bf16.mxu0 0
      %889 = vmatpush1.bf16.msra.mxu0 0
      %890 = vmatprep.subr.bf16.mxu0 0
      %891 = vmatpush1.bf16.msra.mxu0 0
      %892 = vmatprep.subr.bf16.mxu0 0
      %893 = vmatpush1.bf16.msra.mxu0 0
      %894 = vmatprep.subr.bf16.mxu0 0
      %895 = vmatpush1.bf16.msra.mxu0 0
      %896 = vmatprep.subr.bf16.mxu0 0
      %897 = vmatpush1.bf16.msra.mxu0 0
      %898 = vmatprep.subr.bf16.mxu0 0
      %899 = vmatpush1.bf16.msra.mxu0 0
      %900 = vmatprep.subr.bf16.mxu0 0
      %901 = vmatpush1.bf16.msra.mxu0 0
      %902 = vmatprep.subr.bf16.mxu0 0
      %903 = vmatpush1.bf16.msra.mxu0 0
      %904 = vmatprep.subr.bf16.mxu0 0
      %905 = vmatpush1.bf16.msra.mxu0 0
      %906 = vmatprep.subr.bf16.mxu0 0
      %907 = vmatpush1.bf16.msra.mxu0 0
      %908 = vmatprep.subr.bf16.mxu0 0
      %909 = vmatpush1.bf16.msra.mxu0 0
      %910 = vmatprep.subr.bf16.mxu0 0
      %911 = vmatpush1.bf16.msra.mxu0 0
      %912 = vmatprep.subr.bf16.mxu0 0
      %913 = vmatpush1.bf16.msra.mxu0 0
      %914 = vmatprep.subr.bf16.mxu0 0
      %915 = vmatpush1.bf16.msra.mxu0 0
      %916 = vmatprep.mubr.bf16.mxu0 0
      %917 = vmatmul.mubr.bf16.gmra.mrb[0].mxu0 %v879
      %v918 = vpop.f32.mrb[0].mxu0
      %v919 = vadd.f32 0.0, %v918
      %v920 = vpop.f32.mrb[0].mxu0
      %v921 = vadd.f32 0.0, %v920
      %v922 = vpop.f32.mrb[0].mxu0
      %v923 = vadd.f32 0.0, %v922
      %v924 = vpop.f32.mrb[0].mxu0
      %v925 = vadd.f32 0.0, %v924
      %926 = vmatprep.mubr.bf16.mxu0 0
      %927 = vmatmul.mubr.bf16.gmra.mrb[0].mxu0 %v882
      %v928 = vpop.f32.mrb[0].mxu0
      %v929 = vadd.f32 0.0, %v928
      %v930 = vpop.f32.mrb[0].mxu0
      %v931 = vadd.f32 0.0, %v930
      %v932 = vpop.f32.mrb[0].mxu0
      %v933 = vpop.f32.mrb[0].mxu0
      %934 = vdwg.mxu0
      %v935 = vadd.f32 %v824, %v919
      %v936 = vadd.f32 %v825, %v921
      %v937 = vadd.f32 %v826, %v923
      %v938 = vadd.f32 %v827, %v925
      %v939 = vadd.f32 %v828, %v929
      %v940 = vadd.f32 %v829, %v931
      %v941 = vpack.c.bf16 %v417, %v415
      %v942 = vpack.c.bf16 %v418, %v416
      %v943 = vpack.c.bf16 %v421, %v419
      %v944 = vpack.c.bf16 %v422, %v420
      %s945 = scalar_lea.vmem %s3, 48
      %v946 = vld [vmem:[%s945] sm:$0xf]
      %v947 = vld [vmem:[%s945 + $0x4] sm:$0xf]
      %v948 = vld [vmem:[%s945 + $0x8] sm:$0x3]
      %v952 = vunpack.c.l.b16 %v946
      %v953 = vunpack.c.l.b16 %v947
      %v954 = vunpack.c.l.b16 %v948
      %v955 = vpack.c.b16 %v953, %v952
      %v956 = vpack.c.b16 %v954, %v954
      %v958 = vsel %vm591, %v955, 0
      %v961 = vsel %vm591, %v956, 0
      %963 = vmatprep.subr.bf16.mxu0 %v942
      %964 = vmatpush1.bf16.msra.mxu0 %v941
      %965 = vmatprep.subr.bf16.mxu0 %v944
      %966 = vmatpush1.bf16.msra.mxu0 %v943
      %967 = vmatprep.subr.bf16.mxu0 0
      %968 = vmatpush1.bf16.msra.mxu0 0
      %969 = vmatprep.subr.bf16.mxu0 0
      %970 = vmatpush1.bf16.msra.mxu0 0
      %971 = vmatprep.subr.bf16.mxu0 0
      %972 = vmatpush1.bf16.msra.mxu0 0
      %973 = vmatprep.subr.bf16.mxu0 0
      %974 = vmatpush1.bf16.msra.mxu0 0
      %975 = vmatprep.subr.bf16.mxu0 0
      %976 = vmatpush1.bf16.msra.mxu0 0
      %977 = vmatprep.subr.bf16.mxu0 0
      %978 = vmatpush1.bf16.msra.mxu0 0
      %979 = vmatprep.subr.bf16.mxu0 0
      %980 = vmatpush1.bf16.msra.mxu0 0
      %981 = vmatprep.subr.bf16.mxu0 0
      %982 = vmatpush1.bf16.msra.mxu0 0
      %983 = vmatprep.subr.bf16.mxu0 0
      %984 = vmatpush1.bf16.msra.mxu0 0
      %985 = vmatprep.subr.bf16.mxu0 0
      %986 = vmatpush1.bf16.msra.mxu0 0
      %987 = vmatprep.subr.bf16.mxu0 0
      %988 = vmatpush1.bf16.msra.mxu0 0
      %989 = vmatprep.subr.bf16.mxu0 0
      %990 = vmatpush1.bf16.msra.mxu0 0
      %991 = vmatprep.subr.bf16.mxu0 0
      %992 = vmatpush1.bf16.msra.mxu0 0
      %993 = vmatprep.subr.bf16.mxu0 0
      %994 = vmatpush1.bf16.msra.mxu0 0
      %995 = vmatprep.mubr.bf16.mxu0 0
      %996 = vmatmul.mubr.bf16.gmra.mrb[0].mxu0 %v958
      %v997 = vpop.f32.mrb[0].mxu0
      %v998 = vadd.f32 0.0, %v997
      %v999 = vpop.f32.mrb[0].mxu0
      %v1000 = vadd.f32 0.0, %v999
      %v1001 = vpop.f32.mrb[0].mxu0
      %v1002 = vadd.f32 0.0, %v1001
      %v1003 = vpop.f32.mrb[0].mxu0
      %v1004 = vadd.f32 0.0, %v1003
      %1005 = vmatprep.mubr.bf16.mxu0 0
      %1006 = vmatmul.mubr.bf16.gmra.mrb[0].mxu0 %v961
      %v1007 = vpop.f32.mrb[0].mxu0
      %v1008 = vadd.f32 0.0, %v1007
      %v1009 = vpop.f32.mrb[0].mxu0
      %v1010 = vadd.f32 0.0, %v1009
      %v1011 = vpop.f32.mrb[0].mxu0
      %v1012 = vpop.f32.mrb[0].mxu0
      %1013 = vdwg.mxu0
      %v1014 = vadd.f32 %v935, %v998
      %v1015 = vadd.f32 %v936, %v1000
      %v1016 = vadd.f32 %v937, %v1002
      %v1017 = vadd.f32 %v938, %v1004
      %v1018 = vadd.f32 %v939, %v1008
      %v1019 = vadd.f32 %v940, %v1010
      %1020 = vrot.lane.b32.xlu0 %v415, 127
      %v1021 = vpop.permute.xlu0 %1020
      %1022 = vrot.lane.b32.xlu0 %v417, 127
      %v1023 = vpop.permute.xlu0 %1022
      %1024 = vrot.lane.b32.xlu0 %v419, 127
      %v1025 = vpop.permute.xlu0 %1024
      %1026 = vrot.lane.b32.xlu0 %v421, 127
      %v1027 = vpop.permute.xlu0 %1026
      %1028 = vrot.lane.b32.xlu0 %v416, 127
      %v1029 = vpop.permute.xlu0 %1028
      %1030 = vrot.lane.b32.xlu0 %v418, 127
      %v1031 = vpop.permute.xlu0 %1030
      %1032 = vrot.lane.b32.xlu0 %v420, 127
      %v1033 = vpop.permute.xlu0 %1032
      %1034 = vrot.lane.b32.xlu0 %v422, 127
      %v1035 = vpop.permute.xlu0 %1034
      %v1036 = vsel %vm730, %v1021, %v1029
      %v1037 = vsel %vm730, %v1023, %v1031
      %v1038 = vsel %vm730, %v1025, %v1033
      %v1039 = vsel %vm730, %v1027, %v1035
      %v1040 = vsel %vm730, %v1029, %v1021
      %v1041 = vsel %vm730, %v1031, %v1023
      %v1042 = vsel %vm730, %v1033, %v1025
      %v1043 = vsel %vm730, %v1035, %v1027
      %v1044 = vsel %vm741, %v415, %v1036
      %v1045 = vsel %vm742, %v416, %v1040
      %v1046 = vsel %vm741, %v417, %v1037
      %v1047 = vsel %vm742, %v418, %v1041
      %v1048 = vsel %vm741, %v419, %v1038
      %v1049 = vsel %vm742, %v420, %v1042
      %v1050 = vsel %vm741, %v421, %v1039
      %v1051 = vsel %vm742, %v422, %v1043
      %v1052 = vpack.c.bf16 %v1046, %v1044
      %v1053 = vpack.c.bf16 %v1047, %v1045
      %v1054 = vpack.c.bf16 %v1050, %v1048
      %v1055 = vpack.c.bf16 %v1051, %v1049
      %s1056 = scalar_lea.vmem %s3, 60
      %v1057 = vld [vmem:[%s1056] sm:$0xf]
      %v1058 = vld [vmem:[%s1056 + $0x4] sm:$0xf]
      %v1059 = vld [vmem:[%s1056 + $0x8] sm:$0x3]
      %v1063 = vunpack.c.l.b16 %v1057
      %v1064 = vunpack.c.l.b16 %v1058
      %v1065 = vunpack.c.l.b16 %v1059
      %v1066 = vpack.c.b16 %v1064, %v1063
      %v1067 = vpack.c.b16 %v1065, %v1065
      %v1069 = vsel %vm591, %v1066, 0
      %v1072 = vsel %vm591, %v1067, 0
      %1074 = vmatprep.subr.bf16.mxu0 %v1053
      %1075 = vmatpush1.bf16.msra.mxu0 %v1052
      %1076 = vmatprep.subr.bf16.mxu0 %v1055
      %1077 = vmatpush1.bf16.msra.mxu0 %v1054
      %1078 = vmatprep.subr.bf16.mxu0 0
      %1079 = vmatpush1.bf16.msra.mxu0 0
      %1080 = vmatprep.subr.bf16.mxu0 0
      %1081 = vmatpush1.bf16.msra.mxu0 0
      %1082 = vmatprep.subr.bf16.mxu0 0
      %1083 = vmatpush1.bf16.msra.mxu0 0
      %1084 = vmatprep.subr.bf16.mxu0 0
      %1085 = vmatpush1.bf16.msra.mxu0 0
      %1086 = vmatprep.subr.bf16.mxu0 0
      %1087 = vmatpush1.bf16.msra.mxu0 0
      %1088 = vmatprep.subr.bf16.mxu0 0
      %1089 = vmatpush1.bf16.msra.mxu0 0
      %1090 = vmatprep.subr.bf16.mxu0 0
      %1091 = vmatpush1.bf16.msra.mxu0 0
      %1092 = vmatprep.subr.bf16.mxu0 0
      %1093 = vmatpush1.bf16.msra.mxu0 0
      %1094 = vmatprep.subr.bf16.mxu0 0
      %1095 = vmatpush1.bf16.msra.mxu0 0
      %1096 = vmatprep.subr.bf16.mxu0 0
      %1097 = vmatpush1.bf16.msra.mxu0 0
      %1098 = vmatprep.subr.bf16.mxu0 0
      %1099 = vmatpush1.bf16.msra.mxu0 0
      %1100 = vmatprep.subr.bf16.mxu0 0
      %1101 = vmatpush1.bf16.msra.mxu0 0
      %1102 = vmatprep.subr.bf16.mxu0 0
      %1103 = vmatpush1.bf16.msra.mxu0 0
      %1104 = vmatprep.subr.bf16.mxu0 0
      %1105 = vmatpush1.bf16.msra.mxu0 0
      %1106 = vmatprep.mubr.bf16.mxu0 0
      %1107 = vmatmul.mubr.bf16.gmra.mrb[0].mxu0 %v1069
      %v1108 = vpop.f32.mrb[0].mxu0
      %v1109 = vadd.f32 0.0, %v1108
      %v1110 = vpop.f32.mrb[0].mxu0
      %v1111 = vadd.f32 0.0, %v1110
      %v1112 = vpop.f32.mrb[0].mxu0
      %v1113 = vadd.f32 0.0, %v1112
      %v1114 = vpop.f32.mrb[0].mxu0
      %v1115 = vadd.f32 0.0, %v1114
      %1116 = vmatprep.mubr.bf16.mxu0 0
      %1117 = vmatmul.mubr.bf16.gmra.mrb[0].mxu0 %v1072
      %v1118 = vpop.f32.mrb[0].mxu0
      %v1119 = vadd.f32 0.0, %v1118
      %v1120 = vpop.f32.mrb[0].mxu0
      %v1121 = vadd.f32 0.0, %v1120
      %v1122 = vpop.f32.mrb[0].mxu0
      %v1123 = vpop.f32.mrb[0].mxu0
      %1124 = vdwg.mxu0
      %v1125 = vadd.f32 %v1014, %v1109
      %v1126 = vadd.f32 %v1015, %v1111
      %v1127 = vadd.f32 %v1016, %v1113
      %v1128 = vadd.f32 %v1017, %v1115
      %v1129 = vadd.f32 %v1018, %v1119
      %v1130 = vadd.f32 %v1019, %v1121
      %1131 = vrot.lane.b32.xlu0 %v523, 1
      %v1132 = vpop.permute.xlu0 %1131
      %1133 = vrot.lane.b32.xlu0 %v525, 1
      %v1134 = vpop.permute.xlu0 %1133
      %1135 = vrot.lane.b32.xlu0 %v527, 1
      %v1136 = vpop.permute.xlu0 %1135
      %1137 = vrot.lane.b32.xlu0 %v529, 1
      %v1138 = vpop.permute.xlu0 %1137
      %1139 = vrot.lane.b32.xlu0 %v524, 1
      %v1140 = vpop.permute.xlu0 %1139
      %1141 = vrot.lane.b32.xlu0 %v526, 1
      %v1142 = vpop.permute.xlu0 %1141
      %1143 = vrot.lane.b32.xlu0 %v528, 1
      %v1144 = vpop.permute.xlu0 %1143
      %1145 = vrot.lane.b32.xlu0 %v530, 1
      %v1146 = vpop.permute.xlu0 %1145
      %v1147 = vsel %vm547, %v1132, %v1140
      %v1148 = vsel %vm547, %v1134, %v1142
      %v1149 = vsel %vm547, %v1136, %v1144
      %v1150 = vsel %vm547, %v1138, %v1146
      %v1151 = vsel %vm547, %v1140, %v1132
      %v1152 = vsel %vm547, %v1142, %v1134
      %v1153 = vsel %vm547, %v1144, %v1136
      %v1154 = vsel %vm547, %v1146, %v1138
      %v1155 = vsel %vm558, %v523, %v1151
      %v1156 = vsel %vm559, %v524, %v1147
      %v1157 = vsel %vm558, %v525, %v1152
      %v1158 = vsel %vm559, %v526, %v1148
      %v1159 = vsel %vm558, %v527, %v1153
      %v1160 = vsel %vm559, %v528, %v1149
      %v1161 = vsel %vm558, %v529, %v1154
      %v1162 = vsel %vm559, %v530, %v1150
      %v1163 = vpack.c.bf16 %v1157, %v1155
      %v1164 = vpack.c.bf16 %v1158, %v1156
      %v1165 = vpack.c.bf16 %v1161, %v1159
      %v1166 = vpack.c.bf16 %v1162, %v1160
      %s1167 = scalar_lea.vmem %s3, 72
      %v1168 = vld [vmem:[%s1167] sm:$0xf]
      %v1169 = vld [vmem:[%s1167 + $0x4] sm:$0xf]
      %v1170 = vld [vmem:[%s1167 + $0x8] sm:$0x3]
      %v1174 = vunpack.c.l.b16 %v1168
      %v1175 = vunpack.c.l.b16 %v1169
      %v1176 = vunpack.c.l.b16 %v1170
      %v1177 = vpack.c.b16 %v1175, %v1174
      %v1178 = vpack.c.b16 %v1176, %v1176
      %v1180 = vsel %vm591, %v1177, 0
      %v1183 = vsel %vm591, %v1178, 0
      %1185 = vmatprep.subr.bf16.mxu0 %v1164
      %1186 = vmatpush1.bf16.msra.mxu0 %v1163
      %1187 = vmatprep.subr.bf16.mxu0 %v1166
      %1188 = vmatpush1.bf16.msra.mxu0 %v1165
      %1189 = vmatprep.subr.bf16.mxu0 0
      %1190 = vmatpush1.bf16.msra.mxu0 0
      %1191 = vmatprep.subr.bf16.mxu0 0
      %1192 = vmatpush1.bf16.msra.mxu0 0
      %1193 = vmatprep.subr.bf16.mxu0 0
      %1194 = vmatpush1.bf16.msra.mxu0 0
      %1195 = vmatprep.subr.bf16.mxu0 0
      %1196 = vmatpush1.bf16.msra.mxu0 0
      %1197 = vmatprep.subr.bf16.mxu0 0
      %1198 = vmatpush1.bf16.msra.mxu0 0
      %1199 = vmatprep.subr.bf16.mxu0 0
      %1200 = vmatpush1.bf16.msra.mxu0 0
      %1201 = vmatprep.subr.bf16.mxu0 0
      %1202 = vmatpush1.bf16.msra.mxu0 0
      %1203 = vmatprep.subr.bf16.mxu0 0
      %1204 = vmatpush1.bf16.msra.mxu0 0
      %1205 = vmatprep.subr.bf16.mxu0 0
      %1206 = vmatpush1.bf16.msra.mxu0 0
      %1207 = vmatprep.subr.bf16.mxu0 0
      %1208 = vmatpush1.bf16.msra.mxu0 0
      %1209 = vmatprep.subr.bf16.mxu0 0
      %1210 = vmatpush1.bf16.msra.mxu0 0
      %1211 = vmatprep.subr.bf16.mxu0 0
      %1212 = vmatpush1.bf16.msra.mxu0 0
      %1213 = vmatprep.subr.bf16.mxu0 0
      %1214 = vmatpush1.bf16.msra.mxu0 0
      %1215 = vmatprep.subr.bf16.mxu0 0
      %1216 = vmatpush1.bf16.msra.mxu0 0
      %1217 = vmatprep.mubr.bf16.mxu0 0
      %1218 = vmatmul.mubr.bf16.gmra.mrb[0].mxu0 %v1180
      %v1219 = vpop.f32.mrb[0].mxu0
      %v1220 = vadd.f32 0.0, %v1219
      %v1221 = vpop.f32.mrb[0].mxu0
      %v1222 = vadd.f32 0.0, %v1221
      %v1223 = vpop.f32.mrb[0].mxu0
      %v1224 = vadd.f32 0.0, %v1223
      %v1225 = vpop.f32.mrb[0].mxu0
      %v1226 = vadd.f32 0.0, %v1225
      %1227 = vmatprep.mubr.bf16.mxu0 0
      %1228 = vmatmul.mubr.bf16.gmra.mrb[0].mxu0 %v1183
      %v1229 = vpop.f32.mrb[0].mxu0
      %v1230 = vadd.f32 0.0, %v1229
      %v1231 = vpop.f32.mrb[0].mxu0
      %v1232 = vadd.f32 0.0, %v1231
      %v1233 = vpop.f32.mrb[0].mxu0
      %v1234 = vpop.f32.mrb[0].mxu0
      %1235 = vdwg.mxu0
      %v1236 = vadd.f32 %v1125, %v1220
      %v1237 = vadd.f32 %v1126, %v1222
      %v1238 = vadd.f32 %v1127, %v1224
      %v1239 = vadd.f32 %v1128, %v1226
      %v1240 = vadd.f32 %v1129, %v1230
      %v1241 = vadd.f32 %v1130, %v1232
      %v1242 = vpack.c.bf16 %v525, %v523
      %v1243 = vpack.c.bf16 %v526, %v524
      %v1244 = vpack.c.bf16 %v529, %v527
      %v1245 = vpack.c.bf16 %v530, %v528
      %s1246 = scalar_lea.vmem %s3, 84
      %v1247 = vld [vmem:[%s1246] sm:$0xf]
      %v1248 = vld [vmem:[%s1246 + $0x4] sm:$0xf]
      %v1249 = vld [vmem:[%s1246 + $0x8] sm:$0x3]
      %v1253 = vunpack.c.l.b16 %v1247
      %v1254 = vunpack.c.l.b16 %v1248
      %v1255 = vunpack.c.l.b16 %v1249
      %v1256 = vpack.c.b16 %v1254, %v1253
      %v1257 = vpack.c.b16 %v1255, %v1255
      %v1259 = vsel %vm591, %v1256, 0
      %v1262 = vsel %vm591, %v1257, 0
      %1264 = vmatprep.subr.bf16.mxu0 %v1243
      %1265 = vmatpush1.bf16.msra.mxu0 %v1242
      %1266 = vmatprep.subr.bf16.mxu0 %v1245
      %1267 = vmatpush1.bf16.msra.mxu0 %v1244
      %1268 = vmatprep.subr.bf16.mxu0 0
      %1269 = vmatpush1.bf16.msra.mxu0 0
      %1270 = vmatprep.subr.bf16.mxu0 0
      %1271 = vmatpush1.bf16.msra.mxu0 0
      %1272 = vmatprep.subr.bf16.mxu0 0
      %1273 = vmatpush1.bf16.msra.mxu0 0
      %1274 = vmatprep.subr.bf16.mxu0 0
      %1275 = vmatpush1.bf16.msra.mxu0 0
      %1276 = vmatprep.subr.bf16.mxu0 0
      %1277 = vmatpush1.bf16.msra.mxu0 0
      %1278 = vmatprep.subr.bf16.mxu0 0
      %1279 = vmatpush1.bf16.msra.mxu0 0
      %1280 = vmatprep.subr.bf16.mxu0 0
      %1281 = vmatpush1.bf16.msra.mxu0 0
      %1282 = vmatprep.subr.bf16.mxu0 0
      %1283 = vmatpush1.bf16.msra.mxu0 0
      %1284 = vmatprep.subr.bf16.mxu0 0
      %1285 = vmatpush1.bf16.msra.mxu0 0
      %1286 = vmatprep.subr.bf16.mxu0 0
      %1287 = vmatpush1.bf16.msra.mxu0 0
      %1288 = vmatprep.subr.bf16.mxu0 0
      %1289 = vmatpush1.bf16.msra.mxu0 0
      %1290 = vmatprep.subr.bf16.mxu0 0
      %1291 = vmatpush1.bf16.msra.mxu0 0
      %1292 = vmatprep.subr.bf16.mxu0 0
      %1293 = vmatpush1.bf16.msra.mxu0 0
      %1294 = vmatprep.subr.bf16.mxu0 0
      %1295 = vmatpush1.bf16.msra.mxu0 0
      %1296 = vmatprep.mubr.bf16.mxu0 0
      %1297 = vmatmul.mubr.bf16.gmra.mrb[0].mxu0 %v1259
      %v1298 = vpop.f32.mrb[0].mxu0
      %v1299 = vadd.f32 0.0, %v1298
      %v1300 = vpop.f32.mrb[0].mxu0
      %v1301 = vadd.f32 0.0, %v1300
      %v1302 = vpop.f32.mrb[0].mxu0
      %v1303 = vadd.f32 0.0, %v1302
      %v1304 = vpop.f32.mrb[0].mxu0
      %v1305 = vadd.f32 0.0, %v1304
      %1306 = vmatprep.mubr.bf16.mxu0 0
      %1307 = vmatmul.mubr.bf16.gmra.mrb[0].mxu0 %v1262
      %v1308 = vpop.f32.mrb[0].mxu0
      %v1309 = vadd.f32 0.0, %v1308
      %v1310 = vpop.f32.mrb[0].mxu0
      %v1311 = vadd.f32 0.0, %v1310
      %v1312 = vpop.f32.mrb[0].mxu0
      %v1313 = vpop.f32.mrb[0].mxu0
      %1314 = vdwg.mxu0
      %v1315 = vadd.f32 %v1236, %v1299
      %v1316 = vadd.f32 %v1237, %v1301
      %v1317 = vadd.f32 %v1238, %v1303
      %v1318 = vadd.f32 %v1239, %v1305
      %v1319 = vadd.f32 %v1240, %v1309
      %v1320 = vadd.f32 %v1241, %v1311
      %1321 = vrot.lane.b32.xlu0 %v523, 127
      %v1322 = vpop.permute.xlu0 %1321
      %1323 = vrot.lane.b32.xlu0 %v525, 127
      %v1324 = vpop.permute.xlu0 %1323
      %1325 = vrot.lane.b32.xlu0 %v527, 127
      %v1326 = vpop.permute.xlu0 %1325
      %1327 = vrot.lane.b32.xlu0 %v529, 127
      %v1328 = vpop.permute.xlu0 %1327
      %1329 = vrot.lane.b32.xlu0 %v524, 127
      %v1330 = vpop.permute.xlu0 %1329
      %1331 = vrot.lane.b32.xlu0 %v526, 127
      %v1332 = vpop.permute.xlu0 %1331
      %1333 = vrot.lane.b32.xlu0 %v528, 127
      %v1334 = vpop.permute.xlu0 %1333
      %1335 = vrot.lane.b32.xlu0 %v530, 127
      %v1336 = vpop.permute.xlu0 %1335
      %v1337 = vsel %vm730, %v1322, %v1330
      %v1338 = vsel %vm730, %v1324, %v1332
      %v1339 = vsel %vm730, %v1326, %v1334
      %v1340 = vsel %vm730, %v1328, %v1336
      %v1341 = vsel %vm730, %v1330, %v1322
      %v1342 = vsel %vm730, %v1332, %v1324
      %v1343 = vsel %vm730, %v1334, %v1326
      %v1344 = vsel %vm730, %v1336, %v1328
      %v1345 = vsel %vm741, %v523, %v1337
      %v1346 = vsel %vm742, %v524, %v1341
      %v1347 = vsel %vm741, %v525, %v1338
      %v1348 = vsel %vm742, %v526, %v1342
      %v1349 = vsel %vm741, %v527, %v1339
      %v1350 = vsel %vm742, %v528, %v1343
      %v1351 = vsel %vm741, %v529, %v1340
      %v1352 = vsel %vm742, %v530, %v1344
      %v1353 = vpack.c.bf16 %v1347, %v1345
      %v1354 = vpack.c.bf16 %v1348, %v1346
      %v1355 = vpack.c.bf16 %v1351, %v1349
      %v1356 = vpack.c.bf16 %v1352, %v1350
      %s1357 = scalar_lea.vmem %s3, 96
      %v1358 = vld [vmem:[%s1357] sm:$0xf]
      %v1359 = vld [vmem:[%s1357 + $0x4] sm:$0xf]
      %v1360 = vld [vmem:[%s1357 + $0x8] sm:$0x3]
      %v1364 = vunpack.c.l.b16 %v1358
      %v1365 = vunpack.c.l.b16 %v1359
      %v1366 = vunpack.c.l.b16 %v1360
      %v1367 = vpack.c.b16 %v1365, %v1364
      %v1368 = vpack.c.b16 %v1366, %v1366
      %v1370 = vsel %vm591, %v1367, 0
      %v1373 = vsel %vm591, %v1368, 0
      %1375 = vmatprep.subr.bf16.mxu0 %v1354
      %1376 = vmatpush1.bf16.msra.mxu0 %v1353
      %1377 = vmatprep.subr.bf16.mxu0 %v1356
      %1378 = vmatpush1.bf16.msra.mxu0 %v1355
      %1379 = vmatprep.subr.bf16.mxu0 0
      %1380 = vmatpush1.bf16.msra.mxu0 0
      %1381 = vmatprep.subr.bf16.mxu0 0
      %1382 = vmatpush1.bf16.msra.mxu0 0
      %1383 = vmatprep.subr.bf16.mxu0 0
      %1384 = vmatpush1.bf16.msra.mxu0 0
      %1385 = vmatprep.subr.bf16.mxu0 0
      %1386 = vmatpush1.bf16.msra.mxu0 0
      %1387 = vmatprep.subr.bf16.mxu0 0
      %1388 = vmatpush1.bf16.msra.mxu0 0
      %1389 = vmatprep.subr.bf16.mxu0 0
      %1390 = vmatpush1.bf16.msra.mxu0 0
      %1391 = vmatprep.subr.bf16.mxu0 0
      %1392 = vmatpush1.bf16.msra.mxu0 0
      %1393 = vmatprep.subr.bf16.mxu0 0
      %1394 = vmatpush1.bf16.msra.mxu0 0
      %1395 = vmatprep.subr.bf16.mxu0 0
      %1396 = vmatpush1.bf16.msra.mxu0 0
      %1397 = vmatprep.subr.bf16.mxu0 0
      %1398 = vmatpush1.bf16.msra.mxu0 0
      %1399 = vmatprep.subr.bf16.mxu0 0
      %1400 = vmatpush1.bf16.msra.mxu0 0
      %1401 = vmatprep.subr.bf16.mxu0 0
      %1402 = vmatpush1.bf16.msra.mxu0 0
      %1403 = vmatprep.subr.bf16.mxu0 0
      %1404 = vmatpush1.bf16.msra.mxu0 0
      %1405 = vmatprep.subr.bf16.mxu0 0
      %1406 = vmatpush1.bf16.msra.mxu0 0
      %1407 = vmatprep.mubr.bf16.mxu0 0
      %1408 = vmatmul.mubr.bf16.gmra.mrb[0].mxu0 %v1370
      %v1409 = vpop.f32.mrb[0].mxu0
      %v1410 = vadd.f32 0.0, %v1409
      %v1411 = vpop.f32.mrb[0].mxu0
      %v1412 = vadd.f32 0.0, %v1411
      %v1413 = vpop.f32.mrb[0].mxu0
      %v1414 = vadd.f32 0.0, %v1413
      %v1415 = vpop.f32.mrb[0].mxu0
      %v1416 = vadd.f32 0.0, %v1415
      %1417 = vmatprep.mubr.bf16.mxu0 0
      %1418 = vmatmul.mubr.bf16.gmra.mrb[0].mxu0 %v1373
      %v1419 = vpop.f32.mrb[0].mxu0
      %v1420 = vadd.f32 0.0, %v1419
      %v1421 = vpop.f32.mrb[0].mxu0
      %v1422 = vadd.f32 0.0, %v1421
      %v1423 = vpop.f32.mrb[0].mxu0
      %v1424 = vpop.f32.mrb[0].mxu0
      %1425 = vdwg.mxu0
      %v1426 = vadd.f32 %v1315, %v1410
      %v1427 = vadd.f32 %v1316, %v1412
      %v1428 = vadd.f32 %v1317, %v1414
      %v1429 = vadd.f32 %v1318, %v1416
      %v1430 = vadd.f32 %v1319, %v1420
      %v1431 = vadd.f32 %v1320, %v1422
      %v1432 = vld [vmem:[%s4] sm:$0xff]
      %v1433 = vld [vmem:[%s4 + $0x8] sm:$0xff]
      %v1434 = vld [vmem:[%s4 + $0x10] sm:$0xf]
      %1436 = vset.pattern.permute.xlu0 0
      %1437 = vperm.xlu0 %1436, %v1432
      %v1438 = vpop.permute.xlu0 %1437
      %1441 = vset.pattern.permute.xlu0 0
      %1442 = vperm.xlu0 %1441, %v1433
      %v1443 = vpop.permute.xlu0 %1442
      %1446 = vset.pattern.permute.xlu0 0
      %1447 = vperm.xlu0 %1446, %v1434
      %v1448 = vpop.permute.xlu0 %1447
      %v1450 = vadd.f32 %v1426, %v1438
      %v1451 = vadd.f32 %v1427, %v1438
      %v1452 = vadd.f32 %v1428, %v1443
      %v1453 = vadd.f32 %v1429, %v1443
      %v1454 = vadd.f32 %v1430, %v1448
      %v1455 = vadd.f32 %v1431, %v1448
      %v1456 = vmax.f32 %v1450, 0.0
      %v1457 = vmax.f32 %v1451, 0.0
      %v1458 = vmax.f32 %v1452, 0.0
      %v1459 = vmax.f32 %v1453, 0.0
      %v1460 = vmax.f32 %v1454, 0.0
      %v1461 = vmax.f32 %v1455, 0.0
      %v1462 = vpack.c.bf16 %v1458, %v1456
      %v1463 = vpack.c.bf16 %v1459, %v1457
      %v1464 = vpack.c.bf16 %v1460, %v1460
      %v1465 = vpack.c.bf16 %v1461, %v1461
      %v1466 = vld [vmem:[%s5] sm:$0xf]
      %v1467 = vld [vmem:[%s5 + $0x4] sm:$0xf]
      %v1468 = vld [vmem:[%s5 + $0x8] sm:$0x3]
      %v1469 = vld [vmem:[%s6] sm:$0xff]
      %v1470 = vld [vmem:[%s6 + $0x8] sm:$0xff]
      %v1471 = vld [vmem:[%s6 + $0x10] sm:$0xf]
      %1473 = vset.pattern.permute.xlu0 0
      %1474 = vperm.xlu0 %1473, %v1469
      %v1475 = vpop.permute.xlu0 %1474
      %1478 = vset.pattern.permute.xlu0 0
      %1479 = vperm.xlu0 %1478, %v1470
      %v1480 = vpop.permute.xlu0 %1479
      %1483 = vset.pattern.permute.xlu0 0
      %1484 = vperm.xlu0 %1483, %v1471
      %v1485 = vpop.permute.xlu0 %1484
      %v1490 = vunpack.c.l.b16 %v1466
      %v1491 = vunpack.c.l.b16 %v1467
      %v1492 = vunpack.c.l.b16 %v1468
      %v1493 = vpack.c.b16 %v1491, %v1490
      %v1494 = vpack.c.b16 %v1492, %v1492
      %vm1495 = vcmask 162816
      %v1497 = vsel %vm1495, %v1493, 0
      %v1500 = vsel %vm1495, %v1494, 0
      %vm1502 = vcmask 1041408
      %v1504 = vsel %vm1502, %v1464, 0
      %v1507 = vsel %vm1502, %v1465, 0
      %1509 = vmatprep.subr.bf16.mxu0 %v1463
      %1510 = vmatpush1.bf16.msra.mxu0 %v1462
      %1511 = vmatprep.subr.bf16.mxu0 %v1507
      %1512 = vmatpush1.bf16.msra.mxu0 %v1504
      %1513 = vmatprep.subr.bf16.mxu0 0
      %1514 = vmatpush1.bf16.msra.mxu0 0
      %1515 = vmatprep.subr.bf16.mxu0 0
      %1516 = vmatpush1.bf16.msra.mxu0 0
      %1517 = vmatprep.subr.bf16.mxu0 0
      %1518 = vmatpush1.bf16.msra.mxu0 0
      %1519 = vmatprep.subr.bf16.mxu0 0
      %1520 = vmatpush1.bf16.msra.mxu0 0
      %1521 = vmatprep.subr.bf16.mxu0 0
      %1522 = vmatpush1.bf16.msra.mxu0 0
      %1523 = vmatprep.subr.bf16.mxu0 0
      %1524 = vmatpush1.bf16.msra.mxu0 0
      %1525 = vmatprep.subr.bf16.mxu0 0
      %1526 = vmatpush1.bf16.msra.mxu0 0
      %1527 = vmatprep.subr.bf16.mxu0 0
      %1528 = vmatpush1.bf16.msra.mxu0 0
      %1529 = vmatprep.subr.bf16.mxu0 0
      %1530 = vmatpush1.bf16.msra.mxu0 0
      %1531 = vmatprep.subr.bf16.mxu0 0
      %1532 = vmatpush1.bf16.msra.mxu0 0
      %1533 = vmatprep.subr.bf16.mxu0 0
      %1534 = vmatpush1.bf16.msra.mxu0 0
      %1535 = vmatprep.subr.bf16.mxu0 0
      %1536 = vmatpush1.bf16.msra.mxu0 0
      %1537 = vmatprep.subr.bf16.mxu0 0
      %1538 = vmatpush1.bf16.msra.mxu0 0
      %1539 = vmatprep.subr.bf16.mxu0 0
      %1540 = vmatpush1.bf16.msra.mxu0 0
      %1541 = vmatprep.mubr.bf16.mxu0 0
      %1542 = vmatmul.mubr.bf16.gmra.mrb[0].mxu0 %v1497
      %v1543 = vpop.f32.mrb[0].mxu0
      %v1544 = vadd.f32 %v1475, %v1543
      %v1545 = vpop.f32.mrb[0].mxu0
      %v1546 = vadd.f32 %v1475, %v1545
      %v1547 = vpop.f32.mrb[0].mxu0
      %v1548 = vadd.f32 %v1480, %v1547
      %v1549 = vpop.f32.mrb[0].mxu0
      %v1550 = vadd.f32 %v1480, %v1549
      %1551 = vmatprep.mubr.bf16.mxu0 0
      %1552 = vmatmul.mubr.bf16.gmra.mrb[0].mxu0 %v1500
      %v1553 = vpop.f32.mrb[0].mxu0
      %v1554 = vadd.f32 %v1485, %v1553
      %v1555 = vpop.f32.mrb[0].mxu0
      %v1556 = vadd.f32 %v1485, %v1555
      %v1557 = vpop.f32.mrb[0].mxu0
      %v1558 = vpop.f32.mrb[0].mxu0
      %1559 = vdwg.mxu0
      %1560 = vst [vmem:[%s278] sm:$0xff] %v1544
      %1561 = vst [vmem:[%s278 + $0x8] sm:$0xff] %v1546
      %1562 = vst [vmem:[%s278 + $0x10] sm:$0xff] %v1548
      %1563 = vst [vmem:[%s278 + $0x18] sm:$0xff] %v1550
      %1564 = vst [vmem:[%s278 + $0x20] sm:$0xf] %v1554
      %1565 = vst [vmem:[%s278 + $0x28] sm:$0xf] %v1556
      %p1566 = scmp.lt.s32.totalorder %s18, 1
      %s1567 = scalar_select %p1566, %s18, 1
      %s1568 = smul.addr %s1567, 6
      %s1569 = smul.addr %s1568, 8
      %s1570 = scalar_lea.vmem %s7, %s1569
      // Predicated region
      $region49: #{submodel4_forward.1} parent=47 // pred_check
        %p1571 = pneg %p188
      $region50: #{submodel4_forward.1} parent=47 // pred_check_branch
        %1573 = sbr.rel (%p1571) target = $region52
      $region51: #{submodel4_forward.1} parent=47 // pred_region
        _
      $region52: #{submodel4_forward.1} parent=47 // pred_fallthru
        _
    $region48: #{submodel4_forward.1} parent=5 // pred_fallthru
      _
    %p1574 = scmp.le.s32.totalorder 2, %s13
    // Predicated region
    $region53: #{submodel4_forward.1} parent=5 // pred_check
      %p1575 = pneg %p1574
    $region54: #{submodel4_forward.1} parent=5 // pred_check_branch
      %1577 = sbr.rel (%p1575) target = $region56
    $region55: #{submodel4_forward.1} parent=5 // pred_region
      %s1578 = ssub.s32 %s13, 2
      // Predicated region
      $region57: #{submodel4_forward.1} parent=55 // pred_check
        %p1579 = pneg %p194
      $region58: #{submodel4_forward.1} parent=55 // pred_check_branch
        %1581 = sbr.rel (%p1579) target = $region60
      $region59: #{submodel4_forward.1} parent=55 // pred_region
        %p1582 = scmp.lt.s32.totalorder %s19, 1
        %s1583 = scalar_select %p1582, %s19, 1
        %s1584 = smul.addr %s1583, 6
        %s1585 = smul.addr %s1584, 8
        %s1586 = scalar_lea.vmem %s7, %s1585
      $region60: #{submodel4_forward.1} parent=55 // pred_fallthru
        _
    $region56: #{submodel4_forward.1} parent=5 // pred_fallthru
      _
  $region6: #{submodel4_forward.1} parent=0 // loop_footer
    %s17 = sadd.s32 1, %s13
  $region7: #{submodel4_forward.1} parent=0 // loop_footer_branch
    %12 = sbr.rel target = $region3
  $region8: #{submodel4_forward.1} parent=0 // loop_exit
    _

</llo_original>
